<compile_context>
chip_gen: v6e
topology: v6e:2x2x1
jax: 0.10.0
libtpu: 0.0.40
codegen_flags: <defaults>
</compile_context>

<pallas_src>
import functools

import jax
import jax.numpy as jnp
from jax.experimental import pallas as pl
from jax.experimental.pallas import tpu as pltpu


# ------------------------------- fused kernel ---------------------------------

def _fused_attention_kernel(ns_ref, x_ref, noise_ref, wqkv_ref, wproj_ref,
                            bproj_ref, bias_ref, o_ref, *,
                            batch, seq, num_heads, head_dim,
                            lane_dense, matmul_dtype):
    """Whole-batch fused attention (single grid-less invocation).

    ns_ref    : (1,)          SMEM  noise_strength scalar
    x_ref     : (B*N, C)      VMEM
    noise_ref : (B*N, 1)      VMEM
    wqkv_ref  : (C, 3C)       VMEM  (attention scale pre-folded into q columns)
    wproj_ref : (C, C)        VMEM
    bproj_ref : (1, C)        VMEM
    bias_ref  : (H, N, N)     VMEM  precomputed relative-position bias
    o_ref     : (B*N*C/128, 128) or (B*N, C)  VMEM
    """
    B, N, H, hd = batch, seq, num_heads, head_dim
    C = H * hd
    BN = B * N

    def mm(a):  # optionally cast MXU operands (bf16 on v6e/v7x); accumulate in f32
        return a if matmul_dtype is None else a.astype(matmul_dtype)

    ns = ns_ref[0]

    # (1) noise add + QKV projection: all B*N rows in one MXU push.
    xn = x_ref[...] + noise_ref[...] * ns                         # (BN, C)
    qkv = jnp.dot(mm(xn), mm(wqkv_ref[...]),
                  preferred_element_type=jnp.float32)             # (BN, 3C) f32

    # (2) head-stacked q / k / v with index g = h*B + b (leading-dim concats only;
    #     qkv column layout matches torch's reshape(B, N, 3, H, hd)).
    def stack_heads(col0):
        return jnp.concatenate(
            [qkv[:, col0 + h * hd: col0 + (h + 1) * hd].reshape(B, N, hd)
             for h in range(H)],
            axis=0)                                               # (H*B, N, hd)

    q = stack_heads(0)            # scale already folded into W_qkv q columns
    k = stack_heads(C)
    v = stack_heads(2 * C)

    # (3) one batched QK^T, one wide softmax, one batched PV for all (head, batch).
    s = jnp.einsum('gnd,gmd->gnm', mm(q), mm(k),
                   preferred_element_type=jnp.float32)            # (H*B, N, N)
    bias_g = jnp.concatenate(
        [jnp.broadcast_to(bias_ref[h], (B, N, N)) for h in range(H)], axis=0)
    s = s + bias_g

    m = jnp.max(s, axis=-1, keepdims=True)                        # f32 statistics
    p = jnp.exp(s - m)
    denom = jnp.sum(p, axis=-1, keepdims=True)
    p = p * pl.reciprocal(denom, approx=True)                     # attn_drop p=0.0
    ctx = jnp.einsum('gnm,gmd->gnd', mm(p), mm(v),
                     preferred_element_type=jnp.float32)          # (H*B, N, hd)

    # (4) reassemble the (B*N, C) context in vregs (no VMEM scratch round-trip).
    ctx = jnp.concatenate(
        [ctx[h * B:(h + 1) * B].reshape(BN, hd) for h in range(H)], axis=-1)

    # (5) output projection + bias (proj_drop p=0.0), then the store.
    out = jnp.dot(mm(ctx), mm(wproj_ref[...]),
                  preferred_element_type=jnp.float32) + bproj_ref[...]
    out = out.astype(o_ref.dtype)

    if lane_dense:
        # Pack `group` consecutive rows into one 128-wide lane-dense row so the
        # final store is an unmasked vst (leading-dim reshape + lane concats only).
        group = 128 // C
        out3 = out.reshape(BN // group, group, C)
        out = jnp.concatenate([out3[:, j, :] for j in range(group)], axis=-1)
    o_ref[...] = out


# -------------------------------- param prep -----------------------------------

def prepare_rel_pos_bias(rpb_table, window_size):
    """One-time prep: gather + transpose the relative-position bias to (H, W, W)."""
    coords = jnp.arange(window_size)
    rel_idx = coords[:, None] - coords[None, :] + (window_size - 1)     # (W, W)
    bias = rpb_table[rel_idx.reshape(-1)].reshape(window_size, window_size, -1)
    return jnp.transpose(bias, (2, 0, 1)).astype(jnp.float32)           # (H, W, W)


def prepare_attention_params(params, *, dim, num_heads, window_size):
    """One-time, parameter-only transforms (scale folding + rel-pos bias gather)."""
    C = dim
    hd = C // num_heads
    scale = float(hd) ** -0.5
    w_qkv = jnp.asarray(params["w_qkv"], jnp.float32)
    # Fold the attention scale into the q columns (weight-only transform).
    w_qkv = jnp.concatenate([w_qkv[:, :C] * scale, w_qkv[:, C:]], axis=1)
    return {
        "w_qkv": w_qkv,                                                   # (C, 3C)
        "w_proj": jnp.asarray(params["w_proj"], jnp.float32),             # (C, C)
        "b_proj": jnp.asarray(params["b_proj"], jnp.float32).reshape(1, C),
        "rel_pos_bias": prepare_rel_pos_bias(params["rpb_table"], window_size),
        "noise_strength": jnp.reshape(params["noise_strength"], (1,)).astype(jnp.float32),
    }


# ---------------------------------- wrapper -------------------------------------

def attention_forward(x, noise, prepared, *, num_heads, window_size,
                      matmul_dtype=None):
    B, N, C = x.shape
    H = num_heads
    hd = C // H
    assert N == window_size, "rel-pos bias requires N == window_size"
    BN = B * N

    x2d = x.reshape(BN, C)
    noise2d = noise.reshape(BN, 1)

    # Lane-dense output presentation whenever C < 128 (pure layout plumbing).
    lane_dense = (C < 128) and (128 % C == 0) and (BN % (128 // C) == 0)
    if lane_dense:
        out_rows, out_cols = (BN * C) // 128, 128
    else:
        out_rows, out_cols = BN, C

    flops = (2 * BN * C * 3 * C            # QKV matmul
             + 4 * B * H * N * N * hd      # QK^T and PV
             + 2 * BN * C * C)             # output projection
    bytes_accessed = 4 * (2 * x2d.size + noise2d.size
                          + prepared["w_qkv"].size + prepared["w_proj"].size
                          + prepared["b_proj"].size + prepared["rel_pos_bias"].size)
    cost = pl.CostEstimate(flops=flops,
                           transcendentals=B * H * N * N,
                           bytes_accessed=bytes_accessed)

    kernel = functools.partial(
        _fused_attention_kernel,
        batch=B, seq=N, num_heads=H, head_dim=hd,
        lane_dense=lane_dense, matmul_dtype=matmul_dtype)

    # TODO(synk): for large B*N (real window sizes) add a row-tiled grid with
    # flash-style KV tiling; at these sizes a single grid-less call is fastest.
    out2d = pl.pallas_call(
        kernel,
        out_shape=jax.ShapeDtypeStruct((out_rows, out_cols), x.dtype),
        in_specs=[
            pl.BlockSpec(memory_space=pltpu.MemorySpace.SMEM),   # noise_strength (1,)
            pl.BlockSpec(memory_space=pltpu.MemorySpace.VMEM),   # x        (B*N, C)
            pl.BlockSpec(memory_space=pltpu.MemorySpace.VMEM),   # noise    (B*N, 1)
            pl.BlockSpec(memory_space=pltpu.MemorySpace.VMEM),   # W_qkv    (C, 3C)
            pl.BlockSpec(memory_space=pltpu.MemorySpace.VMEM),   # W_proj   (C, C)
            pl.BlockSpec(memory_space=pltpu.MemorySpace.VMEM),   # b_proj   (1, C)
            pl.BlockSpec(memory_space=pltpu.MemorySpace.VMEM),   # rel-pos bias (H,N,N)
        ],
        out_specs=pl.BlockSpec(memory_space=pltpu.MemorySpace.VMEM),
        cost_estimate=cost,
    )(prepared["noise_strength"], x2d, noise2d,
      prepared["w_qkv"], prepared["w_proj"], prepared["b_proj"],
      prepared["rel_pos_bias"])

    return out2d.reshape(B, N, C)


# ------------------------------- reference -------------------------------------

def _reference(x, noise, params, *, num_heads, window_size):
    B, N, C = x.shape
    H = num_heads
    hd = C // H
    scale = float(hd) ** -0.5
    xn = x + noise * params["noise_strength"]
    qkv = jnp.dot(xn.reshape(B * N, C), params["w_qkv"], precision="highest")
    qkv = qkv.reshape(B, N, 3, H, hd).transpose(2, 0, 3, 1, 4)
    q, k, v = qkv[0], qkv[1], qkv[2]
    attn = jnp.einsum("bhnd,bhmd->bhnm", q, k, precision="highest") * scale
    coords = jnp.arange(window_size)
    rel = coords[:, None] - coords[None, :] + window_size - 1
    bias = params["rpb_table"][rel.reshape(-1)].reshape(window_size, window_size, H)
    bias = jnp.transpose(bias, (2, 0, 1))
    attn = jax.nn.softmax(attn + bias[None], axis=-1)
    out = jnp.einsum("bhnm,bhmd->bhnd", attn, v, precision="highest")
    out = out.transpose(0, 2, 1, 3).reshape(B * N, C)
    out = jnp.dot(out, params["w_proj"], precision="highest") + params["b_proj"]
    return out.reshape(B, N, C)


# ---------------------------------- main ----------------------------------------

if __name__ == "__main__":
    B, N, C = 2, 16, 32          # N must equal window_size for the rel-pos bias add
    num_heads, window_size = 4, 16

    key = jax.random.PRNGKey(0)
    kx, kn, kw1, kw2, kb, kt = jax.random.split(key, 6)

    x = jax.random.normal(kx, (B, N, C), jnp.float32)
    # torch.randn([B, N, 1]) equivalent, supplied as an explicit, deterministic input.
    noise = jax.random.normal(kn, (B, N, 1), jnp.float32)

    params = {
        "w_qkv": jax.random.normal(kw1, (C, 3 * C), jnp.float32) * 0.05,   # qkv_bias=False
        "w_proj": jax.random.normal(kw2, (C, C), jnp.float32) * 0.05,
        "b_proj": jax.random.normal(kb, (C,), jnp.float32) * 0.05,
        # trunc_normal_(std=0.02) approximated by plain normal * 0.02 (synthetic init)
        "rpb_table": jax.random.normal(kt, (2 * window_size - 1, num_heads), jnp.float32) * 0.02,
        # module init is torch.zeros([]); use a nonzero value to exercise the noise path
        "noise_strength": jnp.float32(0.05),
    }
    prepared = prepare_attention_params(params, dim=C, num_heads=num_heads,
                                        window_size=window_size)

    fwd = jax.jit(functools.partial(attention_forward,
                                    num_heads=num_heads, window_size=window_size))
    out = jax.block_until_ready(fwd(x, noise, prepared))

    ref = _reference(x, noise, params, num_heads=num_heads, window_size=window_size)
    assert out.shape == (B, N, C)
    assert jnp.allclose(out, ref, atol=2e-2, rtol=2e-2), "mismatch vs pure-JAX reference"

    print("KERNEL_OK")
</pallas_src>

<mosaic_0001>
module attributes {stable_mosaic.version = 11 : i64} {
  func.func @_fused_attention_kernel(%arg0: memref<1xf32, #tpu.memory_space<smem>>, %arg1: memref<32x32xf32, #tpu.memory_space<vmem>>, %arg2: memref<32x1xf32, #tpu.memory_space<vmem>>, %arg3: memref<32x96xf32, #tpu.memory_space<vmem>>, %arg4: memref<32x32xf32, #tpu.memory_space<vmem>>, %arg5: memref<1x32xf32, #tpu.memory_space<vmem>>, %arg6: memref<4x16x16xf32, #tpu.memory_space<vmem>>, %arg7: memref<8x128xf32, #tpu.memory_space<vmem>>) attributes {dimension_semantics = [], scalar_prefetch = 0 : i64, scratch_operands = 0 : i64, tpu.core_type = #tpu.core_type<tc>} {
    %c0 = arith.constant 0 : index
    %0 = memref.load %arg0[%c0] : memref<1xf32, #tpu.memory_space<smem>>
    %c0_0 = arith.constant 0 : index
    %c0_1 = arith.constant 0 : index
    %1 = vector.load %arg1[%c0_0, %c0_1] : memref<32x32xf32, #tpu.memory_space<vmem>>, vector<32x32xf32>
    %c0_2 = arith.constant 0 : index
    %c0_3 = arith.constant 0 : index
    %2 = vector.load %arg2[%c0_2, %c0_3] : memref<32x1xf32, #tpu.memory_space<vmem>>, vector<32x1xf32>
    %3 = vector.broadcast %0 : f32 to vector<32x1xf32>
    %4 = arith.mulf %2, %3 : vector<32x1xf32>
    %5 = vector.broadcast %4 : vector<32x1xf32> to vector<32x32xf32>
    %6 = arith.addf %1, %5 : vector<32x32xf32>
    %c0_4 = arith.constant 0 : index
    %c0_5 = arith.constant 0 : index
    %7 = vector.load %arg3[%c0_4, %c0_5] : memref<32x96xf32, #tpu.memory_space<vmem>>, vector<32x96xf32>
    %cst = arith.constant dense<0.000000e+00> : vector<32x96xf32>
    %8 = tpu.matmul %6, %7, %cst {dimension_numbers = #tpu.dot_dimension_numbers<[1], [0], [0], [1], [0, 0, 1, 1], [], []>} : vector<32x32xf32>, vector<32x96xf32>, vector<32x96xf32> -> vector<32x96xf32>
    %9 = vector.extract_strided_slice %8 {offsets = [0, 0], sizes = [32, 8], strides = [1, 1]} : vector<32x96xf32> to vector<32x8xf32>
    %10 = vector.shape_cast %9 : vector<32x8xf32> to vector<2x16x8xf32>
    %11 = vector.extract_strided_slice %8 {offsets = [0, 8], sizes = [32, 8], strides = [1, 1]} : vector<32x96xf32> to vector<32x8xf32>
    %12 = vector.shape_cast %11 : vector<32x8xf32> to vector<2x16x8xf32>
    %13 = vector.extract_strided_slice %8 {offsets = [0, 16], sizes = [32, 8], strides = [1, 1]} : vector<32x96xf32> to vector<32x8xf32>
    %14 = vector.shape_cast %13 : vector<32x8xf32> to vector<2x16x8xf32>
    %15 = vector.extract_strided_slice %8 {offsets = [0, 24], sizes = [32, 8], strides = [1, 1]} : vector<32x96xf32> to vector<32x8xf32>
    %16 = vector.shape_cast %15 : vector<32x8xf32> to vector<2x16x8xf32>
    %17 = tpu.concatenate %10, %12, %14, %16 in 0 : vector<2x16x8xf32>, vector<2x16x8xf32>, vector<2x16x8xf32>, vector<2x16x8xf32> -> vector<8x16x8xf32>
    %18 = vector.extract_strided_slice %8 {offsets = [0, 32], sizes = [32, 8], strides = [1, 1]} : vector<32x96xf32> to vector<32x8xf32>
    %19 = vector.shape_cast %18 : vector<32x8xf32> to vector<2x16x8xf32>
    %20 = vector.extract_strided_slice %8 {offsets = [0, 40], sizes = [32, 8], strides = [1, 1]} : vector<32x96xf32> to vector<32x8xf32>
    %21 = vector.shape_cast %20 : vector<32x8xf32> to vector<2x16x8xf32>
    %22 = vector.extract_strided_slice %8 {offsets = [0, 48], sizes = [32, 8], strides = [1, 1]} : vector<32x96xf32> to vector<32x8xf32>
    %23 = vector.shape_cast %22 : vector<32x8xf32> to vector<2x16x8xf32>
    %24 = vector.extract_strided_slice %8 {offsets = [0, 56], sizes = [32, 8], strides = [1, 1]} : vector<32x96xf32> to vector<32x8xf32>
    %25 = vector.shape_cast %24 : vector<32x8xf32> to vector<2x16x8xf32>
    %26 = tpu.concatenate %19, %21, %23, %25 in 0 : vector<2x16x8xf32>, vector<2x16x8xf32>, vector<2x16x8xf32>, vector<2x16x8xf32> -> vector<8x16x8xf32>
    %27 = vector.extract_strided_slice %8 {offsets = [0, 64], sizes = [32, 8], strides = [1, 1]} : vector<32x96xf32> to vector<32x8xf32>
    %28 = vector.shape_cast %27 : vector<32x8xf32> to vector<2x16x8xf32>
    %29 = vector.extract_strided_slice %8 {offsets = [0, 72], sizes = [32, 8], strides = [1, 1]} : vector<32x96xf32> to vector<32x8xf32>
    %30 = vector.shape_cast %29 : vector<32x8xf32> to vector<2x16x8xf32>
    %31 = vector.extract_strided_slice %8 {offsets = [0, 80], sizes = [32, 8], strides = [1, 1]} : vector<32x96xf32> to vector<32x8xf32>
    %32 = vector.shape_cast %31 : vector<32x8xf32> to vector<2x16x8xf32>
    %33 = vector.extract_strided_slice %8 {offsets = [0, 88], sizes = [32, 8], strides = [1, 1]} : vector<32x96xf32> to vector<32x8xf32>
    %34 = vector.shape_cast %33 : vector<32x8xf32> to vector<2x16x8xf32>
    %35 = tpu.concatenate %28, %30, %32, %34 in 0 : vector<2x16x8xf32>, vector<2x16x8xf32>, vector<2x16x8xf32>, vector<2x16x8xf32> -> vector<8x16x8xf32>
    "tpu.trace_start"() <{level = 10 : i32, message = "gnd,gmd->gnm"}> : () -> ()
    %cst_6 = arith.constant dense<0.000000e+00> : vector<8x16x16xf32>
    %36 = tpu.matmul %17, %26, %cst_6 {dimension_numbers = #tpu.dot_dimension_numbers<[2], [2], [1], [1], [0, 0, 0, 1, 1, 1], [0], [0]>} : vector<8x16x8xf32>, vector<8x16x8xf32>, vector<8x16x16xf32> -> vector<8x16x16xf32>
    "tpu.trace_stop"() : () -> ()
    %c0_7 = arith.constant 0 : index
    %c0_8 = arith.constant 0 : index
    %c0_9 = arith.constant 0 : index
    %37 = vector.load %arg6[%c0_7, %c0_8, %c0_9] : memref<4x16x16xf32, #tpu.memory_space<vmem>>, vector<1x16x16xf32>
    %38 = vector.shape_cast %37 : vector<1x16x16xf32> to vector<16x16xf32>
    %39 = vector.shape_cast %38 : vector<16x16xf32> to vector<1x16x16xf32>
    %40 = vector.broadcast %39 : vector<1x16x16xf32> to vector<2x16x16xf32>
    %c1 = arith.constant 1 : index
    %c0_10 = arith.constant 0 : index
    %c0_11 = arith.constant 0 : index
    %41 = vector.load %arg6[%c1, %c0_10, %c0_11] : memref<4x16x16xf32, #tpu.memory_space<vmem>>, vector<1x16x16xf32>
    %42 = vector.shape_cast %41 : vector<1x16x16xf32> to vector<16x16xf32>
    %43 = vector.shape_cast %42 : vector<16x16xf32> to vector<1x16x16xf32>
    %44 = vector.broadcast %43 : vector<1x16x16xf32> to vector<2x16x16xf32>
    %c2 = arith.constant 2 : index
    %c0_12 = arith.constant 0 : index
    %c0_13 = arith.constant 0 : index
    %45 = vector.load %arg6[%c2, %c0_12, %c0_13] : memref<4x16x16xf32, #tpu.memory_space<vmem>>, vector<1x16x16xf32>
    %46 = vector.shape_cast %45 : vector<1x16x16xf32> to vector<16x16xf32>
    %47 = vector.shape_cast %46 : vector<16x16xf32> to vector<1x16x16xf32>
    %48 = vector.broadcast %47 : vector<1x16x16xf32> to vector<2x16x16xf32>
    %c3 = arith.constant 3 : index
    %c0_14 = arith.constant 0 : index
    %c0_15 = arith.constant 0 : index
    %49 = vector.load %arg6[%c3, %c0_14, %c0_15] : memref<4x16x16xf32, #tpu.memory_space<vmem>>, vector<1x16x16xf32>
    %50 = vector.shape_cast %49 : vector<1x16x16xf32> to vector<16x16xf32>
    %51 = vector.shape_cast %50 : vector<16x16xf32> to vector<1x16x16xf32>
    %52 = vector.broadcast %51 : vector<1x16x16xf32> to vector<2x16x16xf32>
    %53 = tpu.concatenate %40, %44, %48, %52 in 0 : vector<2x16x16xf32>, vector<2x16x16xf32>, vector<2x16x16xf32>, vector<2x16x16xf32> -> vector<8x16x16xf32>
    %54 = arith.addf %36, %53 : vector<8x16x16xf32>
    %cst_16 = arith.constant dense<0xFF800000> : vector<8x16xf32>
    %55 = vector.multi_reduction <maximumf>, %54, %cst_16 [2] : vector<8x16x16xf32> to vector<8x16xf32>
    %56 = vector.shape_cast %55 : vector<8x16xf32> to vector<8x16x1xf32>
    %57 = vector.broadcast %56 : vector<8x16x1xf32> to vector<8x16x16xf32>
    %58 = arith.subf %54, %57 : vector<8x16x16xf32>
    %59 = math.exp %58 : vector<8x16x16xf32>
    %cst_17 = arith.constant dense<0.000000e+00> : vector<8x16xf32>
    %60 = vector.multi_reduction <add>, %59, %cst_17 [2] : vector<8x16x16xf32> to vector<8x16xf32>
    %61 = vector.shape_cast %60 : vector<8x16xf32> to vector<8x16x1xf32>
    %62 = tpu.reciprocal %61 {approx = true} : vector<8x16x1xf32> -> vector<8x16x1xf32>
    %63 = vector.broadcast %62 : vector<8x16x1xf32> to vector<8x16x16xf32>
    %64 = arith.mulf %59, %63 : vector<8x16x16xf32>
    "tpu.trace_start"() <{level = 10 : i32, message = "gnm,gmd->gnd"}> : () -> ()
    %cst_18 = arith.constant dense<0.000000e+00> : vector<8x16x8xf32>
    %65 = tpu.matmul %64, %35, %cst_18 {dimension_numbers = #tpu.dot_dimension_numbers<[2], [1], [1], [2], [0, 0, 0, 1, 1, 2], [0], [0]>} : vector<8x16x16xf32>, vector<8x16x8xf32>, vector<8x16x8xf32> -> vector<8x16x8xf32>
    "tpu.trace_stop"() : () -> ()
    %66 = vector.extract_strided_slice %65 {offsets = [0, 0, 0], sizes = [2, 16, 8], strides = [1, 1, 1]} : vector<8x16x8xf32> to vector<2x16x8xf32>
    %67 = vector.shape_cast %66 : vector<2x16x8xf32> to vector<32x8xf32>
    %68 = vector.extract_strided_slice %65 {offsets = [2, 0, 0], sizes = [2, 16, 8], strides = [1, 1, 1]} : vector<8x16x8xf32> to vector<2x16x8xf32>
    %69 = vector.shape_cast %68 : vector<2x16x8xf32> to vector<32x8xf32>
    %70 = vector.extract_strided_slice %65 {offsets = [4, 0, 0], sizes = [2, 16, 8], strides = [1, 1, 1]} : vector<8x16x8xf32> to vector<2x16x8xf32>
    %71 = vector.shape_cast %70 : vector<2x16x8xf32> to vector<32x8xf32>
    %72 = vector.extract_strided_slice %65 {offsets = [6, 0, 0], sizes = [2, 16, 8], strides = [1, 1, 1]} : vector<8x16x8xf32> to vector<2x16x8xf32>
    %73 = vector.shape_cast %72 : vector<2x16x8xf32> to vector<32x8xf32>
    %74 = tpu.concatenate %67, %69, %71, %73 in 1 : vector<32x8xf32>, vector<32x8xf32>, vector<32x8xf32>, vector<32x8xf32> -> vector<32x32xf32>
    %c0_19 = arith.constant 0 : index
    %c0_20 = arith.constant 0 : index
    %75 = vector.load %arg4[%c0_19, %c0_20] : memref<32x32xf32, #tpu.memory_space<vmem>>, vector<32x32xf32>
    %cst_21 = arith.constant dense<0.000000e+00> : vector<32x32xf32>
    %76 = tpu.matmul %74, %75, %cst_21 {dimension_numbers = #tpu.dot_dimension_numbers<[1], [0], [0], [1], [0, 0, 1, 1], [], []>} : vector<32x32xf32>, vector<32x32xf32>, vector<32x32xf32> -> vector<32x32xf32>
    %c0_22 = arith.constant 0 : index
    %c0_23 = arith.constant 0 : index
    %77 = vector.load %arg5[%c0_22, %c0_23] : memref<1x32xf32, #tpu.memory_space<vmem>>, vector<1x32xf32>
    %78 = vector.broadcast %77 : vector<1x32xf32> to vector<32x32xf32>
    %79 = arith.addf %76, %78 : vector<32x32xf32>
    %80 = vector.shape_cast %79 : vector<32x32xf32> to vector<8x4x32xf32>
    %81 = vector.extract_strided_slice %80 {offsets = [0, 0, 0], sizes = [8, 1, 32], strides = [1, 1, 1]} : vector<8x4x32xf32> to vector<8x1x32xf32>
    %82 = vector.shape_cast %81 : vector<8x1x32xf32> to vector<8x32xf32>
    %83 = vector.extract_strided_slice %80 {offsets = [0, 1, 0], sizes = [8, 1, 32], strides = [1, 1, 1]} : vector<8x4x32xf32> to vector<8x1x32xf32>
    %84 = vector.shape_cast %83 : vector<8x1x32xf32> to vector<8x32xf32>
    %85 = vector.extract_strided_slice %80 {offsets = [0, 2, 0], sizes = [8, 1, 32], strides = [1, 1, 1]} : vector<8x4x32xf32> to vector<8x1x32xf32>
    %86 = vector.shape_cast %85 : vector<8x1x32xf32> to vector<8x32xf32>
    %87 = vector.extract_strided_slice %80 {offsets = [0, 3, 0], sizes = [8, 1, 32], strides = [1, 1, 1]} : vector<8x4x32xf32> to vector<8x1x32xf32>
    %88 = vector.shape_cast %87 : vector<8x1x32xf32> to vector<8x32xf32>
    %89 = tpu.concatenate %82, %84, %86, %88 in 1 : vector<8x32xf32>, vector<8x32xf32>, vector<8x32xf32>, vector<8x32xf32> -> vector<8x128xf32>
    %c0_24 = arith.constant 0 : index
    %c0_25 = arith.constant 0 : index
    %90 = vector.load %arg7[%c0_24, %c0_25] : memref<8x128xf32, #tpu.memory_space<vmem>>, vector<8x128xf32>
    tpu.vector_store %arg7[%c0_24, %c0_25], %89 {strides = array<i32>} : memref<8x128xf32, #tpu.memory_space<vmem>>, vector<8x128xf32>,
    return
  }
}

</mosaic_0001>

<llo_original>
// kernel: attention_forward.1
$region0: #{attention_forward.1}
  #allocation0 [shape = 'u32[]', space=smem, size = 0x4, offset = 0x4, fixed_abs, tag = 'smem constant byte address 0x4 - core index']
  #allocation1 [shape = 'u32[144,128]{1,0:T(1,128)}', space=vmem, size = 0x12000, scoped, tag = 'internal scratch']
  #allocation2 [shape = 'f32[1]{0:T(128)S(6)}', space=smem, size = 0x200, scoped, tag = 'scoped memory for attention_forward.1']
  %s0 = inlined_call_operand.<no memory space> [shape: f32[1], index: 0, kind: input, shape index: {}]
  %s1 = inlined_call_operand.vmem [shape: f32[32,32], index: 1, kind: input, shape index: {}]
  %s2 = inlined_call_operand.vmem [shape: f32[32,1], index: 2, kind: input, shape index: {}]
  %s3 = inlined_call_operand.hbm [shape: f32[32,96], index: 3, kind: input, shape index: {}]
  %s4 = inlined_call_operand.hbm [shape: f32[32,32], index: 4, kind: input, shape index: {}]
  %s5 = inlined_call_operand.vmem [shape: f32[1,32], index: 5, kind: input, shape index: {}]
  %s6 = inlined_call_operand.hbm [shape: f32[4,16,16], index: 6, kind: input, shape index: {}]
  %s7 = inlined_call_operand.vmem [shape: f32[8,128], index: 7, kind: output, shape index: {}]
  %s8 = sld [smem:[#allocation0]]
  $region50: #{attention_forward.1} parent=0
    _
  %s10 = ssub.s32 1, %s8
  %s11 = scalar_select 0, %s10, %s8
  %12 = sst [smem:[#allocation2]] %s0
  $region1: #{attention_forward.1} parent=0
    #allocation3 [shape = 'u8[16384]{0}', space=vmem, size = 0x4000, scoped, tag = 'input window, operand 3, single buffered']
    #allocation4 [shape = 's32[1]{0}', space=sflag, size = 0x4, scoped, tag = 'scoped memory for attention_forward.1']
    #allocation5 [shape = 'u8[16384]{0}', space=vmem, size = 0x4000, scoped, tag = 'input window, operand 4, single buffered']
    #allocation6 [shape = 's32[1]{0}', space=sflag, size = 0x4, scoped, tag = 'scoped memory for attention_forward.1']
    #allocation7 [shape = 'u8[32768]{0}', space=vmem, size = 0x8000, scoped, tag = 'input window, operand 6, single buffered']
    %13 = vsyncpa [#allocation4], 0
    %14 = vsyncpa [#allocation6], 0
    // Predicated region
    $region2: #{attention_forward.1} parent=1 // pred_check
      _
    $region3: #{attention_forward.1} parent=1 // pred_check_branch
      %16 = sbr.rel (0) target = $region5
    $region4: #{attention_forward.1} parent=1 // pred_region
      _
    $region5: #{attention_forward.1} parent=1 // pred_fallthru
      _
    // Predicated region
    $region6: #{attention_forward.1} parent=1 // pred_check
      _
    $region7: #{attention_forward.1} parent=1 // pred_check_branch
      %18 = sbr.rel (0) target = $region9
    $region8: #{attention_forward.1} parent=1 // pred_region
      _
    $region9: #{attention_forward.1} parent=1 // pred_fallthru
      _
    // Predicated region
    $region10: #{attention_forward.1} parent=1 // pred_check
      _
    $region11: #{attention_forward.1} parent=1 // pred_check_branch
      %20 = sbr.rel (0) target = $region13
    $region12: #{attention_forward.1} parent=1 // pred_region
      _
    $region13: #{attention_forward.1} parent=1 // pred_fallthru
      _
    // Predicated region
    $region14: #{attention_forward.1} parent=1 // pred_check
      _
    $region15: #{attention_forward.1} parent=1 // pred_check_branch
      %22 = sbr.rel (0) target = $region17
    $region16: #{attention_forward.1} parent=1 // pred_region
      %s24 = ssub.s32 512, 512
      %25 = vsyncadd [#allocation4], %s24
      %s26 = sshll.u32 [#allocation3], 4
      %s27 = int_to_ptr.vmem [resolvable:$true] %s26
      %32 = dma.hbm_to_vmem [thread:$0]  %s3, 512, %s27, [#allocation4], 128, 128, 8
    $region17: #{attention_forward.1} parent=1 // pred_fallthru
      _
    // Predicated region
    $region18: #{attention_forward.1} parent=1 // pred_check
      _
    $region19: #{attention_forward.1} parent=1 // pred_check_branch
      %34 = sbr.rel (0) target = $region21
    $region20: #{attention_forward.1} parent=1 // pred_region
      %s36 = ssub.s32 512, 512
      %37 = vsyncadd [#allocation6], %s36
      %s38 = sshll.u32 [#allocation5], 4
      %s39 = int_to_ptr.vmem [resolvable:$true] %s38
      %44 = dma.hbm_to_vmem [thread:$0]  %s4, 512, %s39, [#allocation6], 128, 128, 8
    $region21: #{attention_forward.1} parent=1 // pred_fallthru
      _
    // Predicated region
    $region22: #{attention_forward.1} parent=1 // pred_check
      _
    $region23: #{attention_forward.1} parent=1 // pred_check_branch
      %46 = sbr.rel (0) target = $region25
    $region24: #{attention_forward.1} parent=1 // pred_region
      _
    $region25: #{attention_forward.1} parent=1 // pred_fallthru
      _
    // Predicated region
    $region26: #{attention_forward.1} parent=1 // pred_check
      _
    $region27: #{attention_forward.1} parent=1 // pred_check_branch
      %48 = sbr.rel (0) target = $region29
    $region28: #{attention_forward.1} parent=1 // pred_region
      %s50 = ssub.s32 1024, 1024
      %51 = vsyncadd [#allocation6], %s50
      %s52 = sshll.u32 [#allocation7], 4
      %s53 = int_to_ptr.vmem [resolvable:$true] %s52
      %58 = dma.hbm_to_vmem [thread:$0]  %s6, 1024, %s53, [#allocation6], 128, 128, 8
    $region29: #{attention_forward.1} parent=1 // pred_fallthru
      _
    // Predicated region
    $region30: #{attention_forward.1} parent=1 // pred_check
      _
    $region31: #{attention_forward.1} parent=1 // pred_check_branch
      %60 = sbr.rel (0) target = $region33
    $region32: #{attention_forward.1} parent=1 // pred_region
      %61 = dma.done [#allocation4], 512
    $region33: #{attention_forward.1} parent=1 // pred_fallthru
      _
    // Predicated region
    $region34: #{attention_forward.1} parent=1 // pred_check
      _
    $region35: #{attention_forward.1} parent=1 // pred_check_branch
      %63 = sbr.rel (0) target = $region37
    $region36: #{attention_forward.1} parent=1 // pred_region
      %64 = dma.done [#allocation6], 512
    $region37: #{attention_forward.1} parent=1 // pred_fallthru
      _
    // Predicated region
    $region38: #{attention_forward.1} parent=1 // pred_check
      _
    $region39: #{attention_forward.1} parent=1 // pred_check_branch
      %66 = sbr.rel (0) target = $region41
    $region40: #{attention_forward.1} parent=1 // pred_region
      %67 = dma.done [#allocation6], 1024
    $region41: #{attention_forward.1} parent=1 // pred_fallthru
      _
    %s68 = sld [smem:[#allocation2]]
    %v69 = vld [vmem:[%s1] sm:$0xff]
    %v70 = vld [vmem:[%s1 + $0x8] sm:$0xff]
    %v71 = vld [vmem:[%s1 + $0x10] sm:$0xff]
    %v72 = vld [vmem:[%s1 + $0x18] sm:$0xff]
    %v73 = vld [vmem:[%s2] sm:$0xff]
    %v74 = vld [vmem:[%s2 + $0x8] sm:$0xff]
    %v75 = vld [vmem:[%s2 + $0x10] sm:$0xff]
    %v76 = vld [vmem:[%s2 + $0x18] sm:$0xff]
    %v77 = vstv %s68
    %v78 = vmul.f32 %v73, %v77
    %v79 = vmul.f32 %v74, %v77
    %v80 = vmul.f32 %v75, %v77
    %v81 = vmul.f32 %v76, %v77
    %83 = vset.pattern.permute.xlu0 0
    %84 = vperm.xlu0 %83, %v78
    %v85 = vpop.permute.xlu0 %84
    %88 = vset.pattern.permute.xlu0 0
    %89 = vperm.xlu0 %88, %v79
    %v90 = vpop.permute.xlu0 %89
    %93 = vset.pattern.permute.xlu0 0
    %94 = vperm.xlu0 %93, %v80
    %v95 = vpop.permute.xlu0 %94
    %98 = vset.pattern.permute.xlu0 0
    %99 = vperm.xlu0 %98, %v81
    %v100 = vpop.permute.xlu0 %99
    %v102 = vadd.f32 %v69, %v85
    %v103 = vadd.f32 %v70, %v90
    %v104 = vadd.f32 %v71, %v95
    %v105 = vadd.f32 %v72, %v100
    %v106 = vld [vmem:[#allocation3] sm:$0xff]
    %v107 = vld [vmem:[#allocation3 + $0x8] sm:$0xff]
    %v108 = vld [vmem:[#allocation3 + $0x10] sm:$0xff]
    %v109 = vld [vmem:[#allocation3 + $0x18] sm:$0xff]
    %vm110 = vcmask 261120
    %v112 = vsel %vm110, %v102, 0
    %v115 = vsel %vm110, %v103, 0
    %v118 = vsel %vm110, %v104, 0
    %v121 = vsel %vm110, %v105, 0
    %123 = vmatprep.subr.mxu0 0.0
    %124 = vmatpush1.msra.mxu0 0.0
    %125 = vmatprep.subr.mxu0 0.0
    %126 = vmatpush1.msra.mxu0 0.0
    %127 = vmatprep.subr.mxu0 0.0
    %128 = vmatpush1.msra.mxu0 0.0
    %129 = vmatprep.subr.mxu0 0.0
    %130 = vmatpush1.msra.mxu0 0.0
    %131 = vmatprep.subr.mxu0 0.0
    %132 = vmatpush1.msra.mxu0 0.0
    %133 = vmatprep.subr.mxu0 0.0
    %134 = vmatpush1.msra.mxu0 0.0
    %135 = vmatprep.subr.mxu0 0.0
    %136 = vmatpush1.msra.mxu0 0.0
    %137 = vmatprep.subr.mxu0 0.0
    %138 = vmatpush1.msra.mxu0 0.0
    %139 = vmatprep.subr.mxu0 0.0
    %140 = vmatpush1.msra.mxu0 0.0
    %141 = vmatprep.subr.mxu0 0.0
    %142 = vmatpush1.msra.mxu0 0.0
    %143 = vmatprep.subr.mxu0 0.0
    %144 = vmatpush1.msra.mxu0 0.0
    %145 = vmatprep.subr.mxu0 0.0
    %146 = vmatpush1.msra.mxu0 0.0
    %147 = vmatprep.subr.mxu0 0.0
    %148 = vmatpush1.msra.mxu0 %v109
    %149 = vmatprep.subr.mxu0 0.0
    %150 = vmatpush1.msra.mxu0 %v108
    %151 = vmatprep.subr.mxu0 0.0
    %152 = vmatpush1.msra.mxu0 %v107
    %153 = vmatprep.subr.mxu0 0.0
    %154 = vmatpush1.msra.mxu0 %v106
    %155 = vmatprep.subr.mxu0 0.0
    %156 = vmatpush2.msra.mxu0 0.0
    %157 = vmatprep.subr.mxu0 0.0
    %158 = vmatpush2.msra.mxu0 0.0
    %159 = vmatprep.subr.mxu0 0.0
    %160 = vmatpush2.msra.mxu0 0.0
    %161 = vmatprep.subr.mxu0 0.0
    %162 = vmatpush2.msra.mxu0 0.0
    %163 = vmatprep.subr.mxu0 0.0
    %164 = vmatpush2.msra.mxu0 0.0
    %165 = vmatprep.subr.mxu0 0.0
    %166 = vmatpush2.msra.mxu0 0.0
    %167 = vmatprep.subr.mxu0 0.0
    %168 = vmatpush2.msra.mxu0 0.0
    %169 = vmatprep.subr.mxu0 0.0
    %170 = vmatpush2.msra.mxu0 0.0
    %171 = vmatprep.subr.mxu0 0.0
    %172 = vmatpush2.msra.mxu0 0.0
    %173 = vmatprep.subr.mxu0 0.0
    %174 = vmatpush2.msra.mxu0 0.0
    %175 = vmatprep.subr.mxu0 0.0
    %176 = vmatpush2.msra.mxu0 0.0
    %177 = vmatprep.subr.mxu0 0.0
    %178 = vmatpush2.msra.mxu0 0.0
    %179 = vmatprep.subr.mxu0 0.0
    %180 = vmatpush2.msra.mxu0 0.0
    %181 = vmatprep.subr.mxu0 0.0
    %182 = vmatpush2.msra.mxu0 0.0
    %183 = vmatprep.subr.mxu0 0.0
    %184 = vmatpush2.msra.mxu0 0.0
    %185 = vmatprep.subr.mxu0 0.0
    %186 = vmatpush2.msra.mxu0 0.0
    %187 = vmatprep.mubr.f32.mxu0 0.0
    %188 = vmatmul.mubr.f32.gmra.mxu0 %v112
    %v189 = vpop.f32.mrf.mxu0
    %v190 = vadd.f32 0.0, %v189
    %v191 = vpop.f32.mrf.mxu0
    %192 = vmatprep.mubr.f32.mxu0 0.0
    %193 = vmatmul.mubr.f32.gmra.mxu0 %v115
    %v194 = vpop.f32.mrf.mxu0
    %v195 = vadd.f32 0.0, %v194
    %v196 = vpop.f32.mrf.mxu0
    %197 = vmatprep.mubr.f32.mxu0 0.0
    %198 = vmatmul.mubr.f32.gmra.mxu0 %v118
    %v199 = vpop.f32.mrf.mxu0
    %v200 = vadd.f32 0.0, %v199
    %v201 = vpop.f32.mrf.mxu0
    %202 = vmatprep.mubr.f32.mxu0 0.0
    %203 = vmatmul.mubr.f32.gmra.mxu0 %v121
    %v204 = vpop.f32.mrf.mxu0
    %v205 = vadd.f32 0.0, %v204
    %v206 = vpop.f32.mrf.mxu0
    %207 = vdwg.mxu0
    %212 = vrot.lane.b32.xlu0 %v190, 120
    %v213 = vpop.permute.xlu0 %212
    %214 = vrot.lane.b32.xlu0 %v195, 120
    %v215 = vpop.permute.xlu0 %214
    %216 = vrot.lane.b32.xlu0 %v200, 120
    %v217 = vpop.permute.xlu0 %216
    %218 = vrot.lane.b32.xlu0 %v205, 120
    %v219 = vpop.permute.xlu0 %218
    %220 = vrot.lane.b32.xlu0 %v190, 112
    %v221 = vpop.permute.xlu0 %220
    %222 = vrot.lane.b32.xlu0 %v195, 112
    %v223 = vpop.permute.xlu0 %222
    %224 = vrot.lane.b32.xlu0 %v200, 112
    %v225 = vpop.permute.xlu0 %224
    %226 = vrot.lane.b32.xlu0 %v205, 112
    %v227 = vpop.permute.xlu0 %226
    %228 = vrot.lane.b32.xlu0 %v190, 104
    %v229 = vpop.permute.xlu0 %228
    %230 = vrot.lane.b32.xlu0 %v195, 104
    %v231 = vpop.permute.xlu0 %230
    %232 = vrot.lane.b32.xlu0 %v200, 104
    %v233 = vpop.permute.xlu0 %232
    %234 = vrot.lane.b32.xlu0 %v205, 104
    %v235 = vpop.permute.xlu0 %234
    %v236 = vld [vmem:[#allocation7] sm:$0xff]
    %v237 = vld [vmem:[#allocation7 + $0x8] sm:$0xff]
    %s238 = scalar_lea.vmem [#allocation7], 16
    %v239 = vld [vmem:[%s238] sm:$0xff]
    %v240 = vld [vmem:[%s238 + $0x8] sm:$0xff]
    %s241 = scalar_lea.vmem [#allocation7], 32
    %v242 = vld [vmem:[%s241] sm:$0xff]
    %v243 = vld [vmem:[%s241 + $0x8] sm:$0xff]
    %s244 = scalar_lea.vmem [#allocation7], 48
    %v245 = vld [vmem:[%s244] sm:$0xff]
    %v246 = vld [vmem:[%s244 + $0x8] sm:$0xff]
    %247 = vrot.lane.b32.xlu0 %v190, 96
    %v248 = vpop.permute.xlu0 %247
    %249 = vrot.lane.b32.xlu0 %v195, 96
    %v250 = vpop.permute.xlu0 %249
    %vm251 = vcmask 64512
    %v252 = vsel %vm251, %v190, 0
    %v254 = vsel %vm251, %v195, 0
    %v256 = vsel %vm251, %v248, 0
    %v258 = vsel %vm251, %v250, 0
    %260 = vmatprep.subr.mxu0 0.0
    %261 = vmatpush1.xpose.msra.mxu0 0.0
    %262 = vmatprep.subr.mxu0 0.0
    %263 = vmatpush1.xpose.msra.mxu0 0.0
    %264 = vmatprep.subr.mxu0 0.0
    %265 = vmatpush1.xpose.msra.mxu0 0.0
    %266 = vmatprep.subr.mxu0 0.0
    %267 = vmatpush1.xpose.msra.mxu0 0.0
    %268 = vmatprep.subr.mxu0 0.0
    %269 = vmatpush1.xpose.msra.mxu0 0.0
    %270 = vmatprep.subr.mxu0 0.0
    %271 = vmatpush1.xpose.msra.mxu0 0.0
    %272 = vmatprep.subr.mxu0 0.0
    %273 = vmatpush1.xpose.msra.mxu0 0.0
    %274 = vmatprep.subr.mxu0 0.0
    %275 = vmatpush1.xpose.msra.mxu0 0.0
    %276 = vmatprep.subr.mxu0 0.0
    %277 = vmatpush1.xpose.msra.mxu0 0.0
    %278 = vmatprep.subr.mxu0 0.0
    %279 = vmatpush1.xpose.msra.mxu0 0.0
    %280 = vmatprep.subr.mxu0 0.0
    %281 = vmatpush1.xpose.msra.mxu0 0.0
    %282 = vmatprep.subr.mxu0 0.0
    %283 = vmatpush1.xpose.msra.mxu0 0.0
    %284 = vmatprep.subr.mxu0 0.0
    %285 = vmatpush1.xpose.msra.mxu0 0.0
    %286 = vmatprep.subr.mxu0 0.0
    %287 = vmatpush1.xpose.msra.mxu0 0.0
    %288 = vmatprep.subr.mxu0 0.0
    %289 = vmatpush1.xpose.msra.mxu0 %v258
    %290 = vmatprep.subr.mxu0 0.0
    %291 = vmatpush1.xpose.msra.mxu0 %v256
    %292 = vmatprep.subr.mxu0 0.0
    %293 = vmatpush2.xpose.msra.mxu0 0.0
    %294 = vmatprep.subr.mxu0 0.0
    %295 = vmatpush2.xpose.msra.mxu0 0.0
    %296 = vmatprep.subr.mxu0 0.0
    %297 = vmatpush2.xpose.msra.mxu0 0.0
    %298 = vmatprep.subr.mxu0 0.0
    %299 = vmatpush2.xpose.msra.mxu0 0.0
    %300 = vmatprep.subr.mxu0 0.0
    %301 = vmatpush2.xpose.msra.mxu0 0.0
    %302 = vmatprep.subr.mxu0 0.0
    %303 = vmatpush2.xpose.msra.mxu0 0.0
    %304 = vmatprep.subr.mxu0 0.0
    %305 = vmatpush2.xpose.msra.mxu0 0.0
    %306 = vmatprep.subr.mxu0 0.0
    %307 = vmatpush2.xpose.msra.mxu0 0.0
    %308 = vmatprep.subr.mxu0 0.0
    %309 = vmatpush2.xpose.msra.mxu0 0.0
    %310 = vmatprep.subr.mxu0 0.0
    %311 = vmatpush2.xpose.msra.mxu0 0.0
    %312 = vmatprep.subr.mxu0 0.0
    %313 = vmatpush2.xpose.msra.mxu0 0.0
    %314 = vmatprep.subr.mxu0 0.0
    %315 = vmatpush2.xpose.msra.mxu0 0.0
    %316 = vmatprep.subr.mxu0 0.0
    %317 = vmatpush2.xpose.msra.mxu0 0.0
    %318 = vmatprep.subr.mxu0 0.0
    %319 = vmatpush2.xpose.msra.mxu0 0.0
    %320 = vmatprep.subr.mxu0 0.0
    %321 = vmatpush2.xpose.msra.mxu0 0.0
    %322 = vmatprep.subr.mxu0 0.0
    %323 = vmatpush2.xpose.msra.mxu0 0.0
    %324 = vmatprep.mubr.f32.mxu0 0.0
    %325 = vmatmul.mubr.f32.gmra.mxu0 %v252
    %v326 = vpop.f32.mrf.mxu0
    %v327 = vadd.f32 %v236, %v326
    %v328 = vpop.f32.mrf.mxu0
    %329 = vmatprep.mubr.f32.mxu0 0.0
    %330 = vmatmul.mubr.f32.gmra.mxu0 %v254
    %v331 = vpop.f32.mrf.mxu0
    %v332 = vadd.f32 %v237, %v331
    %v333 = vpop.f32.mrf.mxu0
    %334 = vdwg.mxu0
    %335 = vrot.lane.b32.xlu0 %v200, 96
    %v336 = vpop.permute.xlu0 %335
    %337 = vrot.lane.b32.xlu0 %v205, 96
    %v338 = vpop.permute.xlu0 %337
    %v339 = vsel %vm251, %v200, 0
    %v341 = vsel %vm251, %v205, 0
    %v343 = vsel %vm251, %v336, 0
    %v345 = vsel %vm251, %v338, 0
    %347 = vmatprep.subr.mxu0 0.0
    %348 = vmatpush1.xpose.msra.mxu0 0.0
    %349 = vmatprep.subr.mxu0 0.0
    %350 = vmatpush1.xpose.msra.mxu0 0.0
    %351 = vmatprep.subr.mxu0 0.0
    %352 = vmatpush1.xpose.msra.mxu0 0.0
    %353 = vmatprep.subr.mxu0 0.0
    %354 = vmatpush1.xpose.msra.mxu0 0.0
    %355 = vmatprep.subr.mxu0 0.0
    %356 = vmatpush1.xpose.msra.mxu0 0.0
    %357 = vmatprep.subr.mxu0 0.0
    %358 = vmatpush1.xpose.msra.mxu0 0.0
    %359 = vmatprep.subr.mxu0 0.0
    %360 = vmatpush1.xpose.msra.mxu0 0.0
    %361 = vmatprep.subr.mxu0 0.0
    %362 = vmatpush1.xpose.msra.mxu0 0.0
    %363 = vmatprep.subr.mxu0 0.0
    %364 = vmatpush1.xpose.msra.mxu0 0.0
    %365 = vmatprep.subr.mxu0 0.0
    %366 = vmatpush1.xpose.msra.mxu0 0.0
    %367 = vmatprep.subr.mxu0 0.0
    %368 = vmatpush1.xpose.msra.mxu0 0.0
    %369 = vmatprep.subr.mxu0 0.0
    %370 = vmatpush1.xpose.msra.mxu0 0.0
    %371 = vmatprep.subr.mxu0 0.0
    %372 = vmatpush1.xpose.msra.mxu0 0.0
    %373 = vmatprep.subr.mxu0 0.0
    %374 = vmatpush1.xpose.msra.mxu0 0.0
    %375 = vmatprep.subr.mxu0 0.0
    %376 = vmatpush1.xpose.msra.mxu0 %v345
    %377 = vmatprep.subr.mxu0 0.0
    %378 = vmatpush1.xpose.msra.mxu0 %v343
    %379 = vmatprep.subr.mxu0 0.0
    %380 = vmatpush2.xpose.msra.mxu0 0.0
    %381 = vmatprep.subr.mxu0 0.0
    %382 = vmatpush2.xpose.msra.mxu0 0.0
    %383 = vmatprep.subr.mxu0 0.0
    %384 = vmatpush2.xpose.msra.mxu0 0.0
    %385 = vmatprep.subr.mxu0 0.0
    %386 = vmatpush2.xpose.msra.mxu0 0.0
    %387 = vmatprep.subr.mxu0 0.0
    %388 = vmatpush2.xpose.msra.mxu0 0.0
    %389 = vmatprep.subr.mxu0 0.0
    %390 = vmatpush2.xpose.msra.mxu0 0.0
    %391 = vmatprep.subr.mxu0 0.0
    %392 = vmatpush2.xpose.msra.mxu0 0.0
    %393 = vmatprep.subr.mxu0 0.0
    %394 = vmatpush2.xpose.msra.mxu0 0.0
    %395 = vmatprep.subr.mxu0 0.0
    %396 = vmatpush2.xpose.msra.mxu0 0.0
    %397 = vmatprep.subr.mxu0 0.0
    %398 = vmatpush2.xpose.msra.mxu0 0.0
    %399 = vmatprep.subr.mxu0 0.0
    %400 = vmatpush2.xpose.msra.mxu0 0.0
    %401 = vmatprep.subr.mxu0 0.0
    %402 = vmatpush2.xpose.msra.mxu0 0.0
    %403 = vmatprep.subr.mxu0 0.0
    %404 = vmatpush2.xpose.msra.mxu0 0.0
    %405 = vmatprep.subr.mxu0 0.0
    %406 = vmatpush2.xpose.msra.mxu0 0.0
    %407 = vmatprep.subr.mxu0 0.0
    %408 = vmatpush2.xpose.msra.mxu0 0.0
    %409 = vmatprep.subr.mxu0 0.0
    %410 = vmatpush2.xpose.msra.mxu0 0.0
    %411 = vmatprep.mubr.f32.mxu0 0.0
    %412 = vmatmul.mubr.f32.gmra.mxu0 %v339
    %v413 = vpop.f32.mrf.mxu0
    %v414 = vadd.f32 %v236, %v413
    %v415 = vpop.f32.mrf.mxu0
    %416 = vmatprep.mubr.f32.mxu0 0.0
    %417 = vmatmul.mubr.f32.gmra.mxu0 %v341
    %v418 = vpop.f32.mrf.mxu0
    %v419 = vadd.f32 %v237, %v418
    %v420 = vpop.f32.mrf.mxu0
    %421 = vdwg.mxu0
    %422 = vrot.lane.b32.xlu0 %v213, 96
    %v423 = vpop.permute.xlu0 %422
    %424 = vrot.lane.b32.xlu0 %v215, 96
    %v425 = vpop.permute.xlu0 %424
    %v426 = vsel %vm251, %v213, 0
    %v428 = vsel %vm251, %v215, 0
    %v430 = vsel %vm251, %v423, 0
    %v432 = vsel %vm251, %v425, 0
    %434 = vmatprep.subr.mxu0 0.0
    %435 = vmatpush1.xpose.msra.mxu0 0.0
    %436 = vmatprep.subr.mxu0 0.0
    %437 = vmatpush1.xpose.msra.mxu0 0.0
    %438 = vmatprep.subr.mxu0 0.0
    %439 = vmatpush1.xpose.msra.mxu0 0.0
    %440 = vmatprep.subr.mxu0 0.0
    %441 = vmatpush1.xpose.msra.mxu0 0.0
    %442 = vmatprep.subr.mxu0 0.0
    %443 = vmatpush1.xpose.msra.mxu0 0.0
    %444 = vmatprep.subr.mxu0 0.0
    %445 = vmatpush1.xpose.msra.mxu0 0.0
    %446 = vmatprep.subr.mxu0 0.0
    %447 = vmatpush1.xpose.msra.mxu0 0.0
    %448 = vmatprep.subr.mxu0 0.0
    %449 = vmatpush1.xpose.msra.mxu0 0.0
    %450 = vmatprep.subr.mxu0 0.0
    %451 = vmatpush1.xpose.msra.mxu0 0.0
    %452 = vmatprep.subr.mxu0 0.0
    %453 = vmatpush1.xpose.msra.mxu0 0.0
    %454 = vmatprep.subr.mxu0 0.0
    %455 = vmatpush1.xpose.msra.mxu0 0.0
    %456 = vmatprep.subr.mxu0 0.0
    %457 = vmatpush1.xpose.msra.mxu0 0.0
    %458 = vmatprep.subr.mxu0 0.0
    %459 = vmatpush1.xpose.msra.mxu0 0.0
    %460 = vmatprep.subr.mxu0 0.0
    %461 = vmatpush1.xpose.msra.mxu0 0.0
    %462 = vmatprep.subr.mxu0 0.0
    %463 = vmatpush1.xpose.msra.mxu0 %v432
    %464 = vmatprep.subr.mxu0 0.0
    %465 = vmatpush1.xpose.msra.mxu0 %v430
    %466 = vmatprep.subr.mxu0 0.0
    %467 = vmatpush2.xpose.msra.mxu0 0.0
    %468 = vmatprep.subr.mxu0 0.0
    %469 = vmatpush2.xpose.msra.mxu0 0.0
    %470 = vmatprep.subr.mxu0 0.0
    %471 = vmatpush2.xpose.msra.mxu0 0.0
    %472 = vmatprep.subr.mxu0 0.0
    %473 = vmatpush2.xpose.msra.mxu0 0.0
    %474 = vmatprep.subr.mxu0 0.0
    %475 = vmatpush2.xpose.msra.mxu0 0.0
    %476 = vmatprep.subr.mxu0 0.0
    %477 = vmatpush2.xpose.msra.mxu0 0.0
    %478 = vmatprep.subr.mxu0 0.0
    %479 = vmatpush2.xpose.msra.mxu0 0.0
    %480 = vmatprep.subr.mxu0 0.0
    %481 = vmatpush2.xpose.msra.mxu0 0.0
    %482 = vmatprep.subr.mxu0 0.0
    %483 = vmatpush2.xpose.msra.mxu0 0.0
    %484 = vmatprep.subr.mxu0 0.0
    %485 = vmatpush2.xpose.msra.mxu0 0.0
    %486 = vmatprep.subr.mxu0 0.0
    %487 = vmatpush2.xpose.msra.mxu0 0.0
    %488 = vmatprep.subr.mxu0 0.0
    %489 = vmatpush2.xpose.msra.mxu0 0.0
    %490 = vmatprep.subr.mxu0 0.0
    %491 = vmatpush2.xpose.msra.mxu0 0.0
    %492 = vmatprep.subr.mxu0 0.0
    %493 = vmatpush2.xpose.msra.mxu0 0.0
    %494 = vmatprep.subr.mxu0 0.0
    %495 = vmatpush2.xpose.msra.mxu0 0.0
    %496 = vmatprep.subr.mxu0 0.0
    %497 = vmatpush2.xpose.msra.mxu0 0.0
    %498 = vmatprep.mubr.f32.mxu0 0.0
    %499 = vmatmul.mubr.f32.gmra.mxu0 %v426
    %v500 = vpop.f32.mrf.mxu0
    %v501 = vadd.f32 %v239, %v500
    %v502 = vpop.f32.mrf.mxu0
    %503 = vmatprep.mubr.f32.mxu0 0.0
    %504 = vmatmul.mubr.f32.gmra.mxu0 %v428
    %v505 = vpop.f32.mrf.mxu0
    %v506 = vadd.f32 %v240, %v505
    %v507 = vpop.f32.mrf.mxu0
    %508 = vdwg.mxu0
    %509 = vrot.lane.b32.xlu0 %v217, 96
    %v510 = vpop.permute.xlu0 %509
    %511 = vrot.lane.b32.xlu0 %v219, 96
    %v512 = vpop.permute.xlu0 %511
    %v513 = vsel %vm251, %v217, 0
    %v515 = vsel %vm251, %v219, 0
    %v517 = vsel %vm251, %v510, 0
    %v519 = vsel %vm251, %v512, 0
    %521 = vmatprep.subr.mxu0 0.0
    %522 = vmatpush1.xpose.msra.mxu0 0.0
    %523 = vmatprep.subr.mxu0 0.0
    %524 = vmatpush1.xpose.msra.mxu0 0.0
    %525 = vmatprep.subr.mxu0 0.0
    %526 = vmatpush1.xpose.msra.mxu0 0.0
    %527 = vmatprep.subr.mxu0 0.0
    %528 = vmatpush1.xpose.msra.mxu0 0.0
    %529 = vmatprep.subr.mxu0 0.0
    %530 = vmatpush1.xpose.msra.mxu0 0.0
    %531 = vmatprep.subr.mxu0 0.0
    %532 = vmatpush1.xpose.msra.mxu0 0.0
    %533 = vmatprep.subr.mxu0 0.0
    %534 = vmatpush1.xpose.msra.mxu0 0.0
    %535 = vmatprep.subr.mxu0 0.0
    %536 = vmatpush1.xpose.msra.mxu0 0.0
    %537 = vmatprep.subr.mxu0 0.0
    %538 = vmatpush1.xpose.msra.mxu0 0.0
    %539 = vmatprep.subr.mxu0 0.0
    %540 = vmatpush1.xpose.msra.mxu0 0.0
    %541 = vmatprep.subr.mxu0 0.0
    %542 = vmatpush1.xpose.msra.mxu0 0.0
    %543 = vmatprep.subr.mxu0 0.0
    %544 = vmatpush1.xpose.msra.mxu0 0.0
    %545 = vmatprep.subr.mxu0 0.0
    %546 = vmatpush1.xpose.msra.mxu0 0.0
    %547 = vmatprep.subr.mxu0 0.0
    %548 = vmatpush1.xpose.msra.mxu0 0.0
    %549 = vmatprep.subr.mxu0 0.0
    %550 = vmatpush1.xpose.msra.mxu0 %v519
    %551 = vmatprep.subr.mxu0 0.0
    %552 = vmatpush1.xpose.msra.mxu0 %v517
    %553 = vmatprep.subr.mxu0 0.0
    %554 = vmatpush2.xpose.msra.mxu0 0.0
    %555 = vmatprep.subr.mxu0 0.0
    %556 = vmatpush2.xpose.msra.mxu0 0.0
    %557 = vmatprep.subr.mxu0 0.0
    %558 = vmatpush2.xpose.msra.mxu0 0.0
    %559 = vmatprep.subr.mxu0 0.0
    %560 = vmatpush2.xpose.msra.mxu0 0.0
    %561 = vmatprep.subr.mxu0 0.0
    %562 = vmatpush2.xpose.msra.mxu0 0.0
    %563 = vmatprep.subr.mxu0 0.0
    %564 = vmatpush2.xpose.msra.mxu0 0.0
    %565 = vmatprep.subr.mxu0 0.0
    %566 = vmatpush2.xpose.msra.mxu0 0.0
    %567 = vmatprep.subr.mxu0 0.0
    %568 = vmatpush2.xpose.msra.mxu0 0.0
    %569 = vmatprep.subr.mxu0 0.0
    %570 = vmatpush2.xpose.msra.mxu0 0.0
    %571 = vmatprep.subr.mxu0 0.0
    %572 = vmatpush2.xpose.msra.mxu0 0.0
    %573 = vmatprep.subr.mxu0 0.0
    %574 = vmatpush2.xpose.msra.mxu0 0.0
    %575 = vmatprep.subr.mxu0 0.0
    %576 = vmatpush2.xpose.msra.mxu0 0.0
    %577 = vmatprep.subr.mxu0 0.0
    %578 = vmatpush2.xpose.msra.mxu0 0.0
    %579 = vmatprep.subr.mxu0 0.0
    %580 = vmatpush2.xpose.msra.mxu0 0.0
    %581 = vmatprep.subr.mxu0 0.0
    %582 = vmatpush2.xpose.msra.mxu0 0.0
    %583 = vmatprep.subr.mxu0 0.0
    %584 = vmatpush2.xpose.msra.mxu0 0.0
    %585 = vmatprep.mubr.f32.mxu0 0.0
    %586 = vmatmul.mubr.f32.gmra.mxu0 %v513
    %v587 = vpop.f32.mrf.mxu0
    %v588 = vadd.f32 %v239, %v587
    %v589 = vpop.f32.mrf.mxu0
    %590 = vmatprep.mubr.f32.mxu0 0.0
    %591 = vmatmul.mubr.f32.gmra.mxu0 %v515
    %v592 = vpop.f32.mrf.mxu0
    %v593 = vadd.f32 %v240, %v592
    %v594 = vpop.f32.mrf.mxu0
    %595 = vdwg.mxu0
    %596 = vrot.lane.b32.xlu0 %v221, 96
    %v597 = vpop.permute.xlu0 %596
    %598 = vrot.lane.b32.xlu0 %v223, 96
    %v599 = vpop.permute.xlu0 %598
    %v600 = vsel %vm251, %v221, 0
    %v602 = vsel %vm251, %v223, 0
    %v604 = vsel %vm251, %v597, 0
    %v606 = vsel %vm251, %v599, 0
    %608 = vmatprep.subr.mxu0 0.0
    %609 = vmatpush1.xpose.msra.mxu0 0.0
    %610 = vmatprep.subr.mxu0 0.0
    %611 = vmatpush1.xpose.msra.mxu0 0.0
    %612 = vmatprep.subr.mxu0 0.0
    %613 = vmatpush1.xpose.msra.mxu0 0.0
    %614 = vmatprep.subr.mxu0 0.0
    %615 = vmatpush1.xpose.msra.mxu0 0.0
    %616 = vmatprep.subr.mxu0 0.0
    %617 = vmatpush1.xpose.msra.mxu0 0.0
    %618 = vmatprep.subr.mxu0 0.0
    %619 = vmatpush1.xpose.msra.mxu0 0.0
    %620 = vmatprep.subr.mxu0 0.0
    %621 = vmatpush1.xpose.msra.mxu0 0.0
    %622 = vmatprep.subr.mxu0 0.0
    %623 = vmatpush1.xpose.msra.mxu0 0.0
    %624 = vmatprep.subr.mxu0 0.0
    %625 = vmatpush1.xpose.msra.mxu0 0.0
    %626 = vmatprep.subr.mxu0 0.0
    %627 = vmatpush1.xpose.msra.mxu0 0.0
    %628 = vmatprep.subr.mxu0 0.0
    %629 = vmatpush1.xpose.msra.mxu0 0.0
    %630 = vmatprep.subr.mxu0 0.0
    %631 = vmatpush1.xpose.msra.mxu0 0.0
    %632 = vmatprep.subr.mxu0 0.0
    %633 = vmatpush1.xpose.msra.mxu0 0.0
    %634 = vmatprep.subr.mxu0 0.0
    %635 = vmatpush1.xpose.msra.mxu0 0.0
    %636 = vmatprep.subr.mxu0 0.0
    %637 = vmatpush1.xpose.msra.mxu0 %v606
    %638 = vmatprep.subr.mxu0 0.0
    %639 = vmatpush1.xpose.msra.mxu0 %v604
    %640 = vmatprep.subr.mxu0 0.0
    %641 = vmatpush2.xpose.msra.mxu0 0.0
    %642 = vmatprep.subr.mxu0 0.0
    %643 = vmatpush2.xpose.msra.mxu0 0.0
    %644 = vmatprep.subr.mxu0 0.0
    %645 = vmatpush2.xpose.msra.mxu0 0.0
    %646 = vmatprep.subr.mxu0 0.0
    %647 = vmatpush2.xpose.msra.mxu0 0.0
    %648 = vmatprep.subr.mxu0 0.0
    %649 = vmatpush2.xpose.msra.mxu0 0.0
    %650 = vmatprep.subr.mxu0 0.0
    %651 = vmatpush2.xpose.msra.mxu0 0.0
    %652 = vmatprep.subr.mxu0 0.0
    %653 = vmatpush2.xpose.msra.mxu0 0.0
    %654 = vmatprep.subr.mxu0 0.0
    %655 = vmatpush2.xpose.msra.mxu0 0.0
    %656 = vmatprep.subr.mxu0 0.0
    %657 = vmatpush2.xpose.msra.mxu0 0.0
    %658 = vmatprep.subr.mxu0 0.0
    %659 = vmatpush2.xpose.msra.mxu0 0.0
    %660 = vmatprep.subr.mxu0 0.0
    %661 = vmatpush2.xpose.msra.mxu0 0.0
    %662 = vmatprep.subr.mxu0 0.0
    %663 = vmatpush2.xpose.msra.mxu0 0.0
    %664 = vmatprep.subr.mxu0 0.0
    %665 = vmatpush2.xpose.msra.mxu0 0.0
    %666 = vmatprep.subr.mxu0 0.0
    %667 = vmatpush2.xpose.msra.mxu0 0.0
    %668 = vmatprep.subr.mxu0 0.0
    %669 = vmatpush2.xpose.msra.mxu0 0.0
    %670 = vmatprep.subr.mxu0 0.0
    %671 = vmatpush2.xpose.msra.mxu0 0.0
    %672 = vmatprep.mubr.f32.mxu0 0.0
    %673 = vmatmul.mubr.f32.gmra.mxu0 %v600
    %v674 = vpop.f32.mrf.mxu0
    %v675 = vadd.f32 %v242, %v674
    %v676 = vpop.f32.mrf.mxu0
    %677 = vmatprep.mubr.f32.mxu0 0.0
    %678 = vmatmul.mubr.f32.gmra.mxu0 %v602
    %v679 = vpop.f32.mrf.mxu0
    %v680 = vadd.f32 %v243, %v679
    %v681 = vpop.f32.mrf.mxu0
    %682 = vdwg.mxu0
    %683 = vrot.lane.b32.xlu0 %v225, 96
    %v684 = vpop.permute.xlu0 %683
    %685 = vrot.lane.b32.xlu0 %v227, 96
    %v686 = vpop.permute.xlu0 %685
    %v687 = vsel %vm251, %v225, 0
    %v689 = vsel %vm251, %v227, 0
    %v691 = vsel %vm251, %v684, 0
    %v693 = vsel %vm251, %v686, 0
    %695 = vmatprep.subr.mxu0 0.0
    %696 = vmatpush1.xpose.msra.mxu0 0.0
    %697 = vmatprep.subr.mxu0 0.0
    %698 = vmatpush1.xpose.msra.mxu0 0.0
    %699 = vmatprep.subr.mxu0 0.0
    %700 = vmatpush1.xpose.msra.mxu0 0.0
    %701 = vmatprep.subr.mxu0 0.0
    %702 = vmatpush1.xpose.msra.mxu0 0.0
    %703 = vmatprep.subr.mxu0 0.0
    %704 = vmatpush1.xpose.msra.mxu0 0.0
    %705 = vmatprep.subr.mxu0 0.0
    %706 = vmatpush1.xpose.msra.mxu0 0.0
    %707 = vmatprep.subr.mxu0 0.0
    %708 = vmatpush1.xpose.msra.mxu0 0.0
    %709 = vmatprep.subr.mxu0 0.0
    %710 = vmatpush1.xpose.msra.mxu0 0.0
    %711 = vmatprep.subr.mxu0 0.0
    %712 = vmatpush1.xpose.msra.mxu0 0.0
    %713 = vmatprep.subr.mxu0 0.0
    %714 = vmatpush1.xpose.msra.mxu0 0.0
    %715 = vmatprep.subr.mxu0 0.0
    %716 = vmatpush1.xpose.msra.mxu0 0.0
    %717 = vmatprep.subr.mxu0 0.0
    %718 = vmatpush1.xpose.msra.mxu0 0.0
    %719 = vmatprep.subr.mxu0 0.0
    %720 = vmatpush1.xpose.msra.mxu0 0.0
    %721 = vmatprep.subr.mxu0 0.0
    %722 = vmatpush1.xpose.msra.mxu0 0.0
    %723 = vmatprep.subr.mxu0 0.0
    %724 = vmatpush1.xpose.msra.mxu0 %v693
    %725 = vmatprep.subr.mxu0 0.0
    %726 = vmatpush1.xpose.msra.mxu0 %v691
    %727 = vmatprep.subr.mxu0 0.0
    %728 = vmatpush2.xpose.msra.mxu0 0.0
    %729 = vmatprep.subr.mxu0 0.0
    %730 = vmatpush2.xpose.msra.mxu0 0.0
    %731 = vmatprep.subr.mxu0 0.0
    %732 = vmatpush2.xpose.msra.mxu0 0.0
    %733 = vmatprep.subr.mxu0 0.0
    %734 = vmatpush2.xpose.msra.mxu0 0.0
    %735 = vmatprep.subr.mxu0 0.0
    %736 = vmatpush2.xpose.msra.mxu0 0.0
    %737 = vmatprep.subr.mxu0 0.0
    %738 = vmatpush2.xpose.msra.mxu0 0.0
    %739 = vmatprep.subr.mxu0 0.0
    %740 = vmatpush2.xpose.msra.mxu0 0.0
    %741 = vmatprep.subr.mxu0 0.0
    %742 = vmatpush2.xpose.msra.mxu0 0.0
    %743 = vmatprep.subr.mxu0 0.0
    %744 = vmatpush2.xpose.msra.mxu0 0.0
    %745 = vmatprep.subr.mxu0 0.0
    %746 = vmatpush2.xpose.msra.mxu0 0.0
    %747 = vmatprep.subr.mxu0 0.0
    %748 = vmatpush2.xpose.msra.mxu0 0.0
    %749 = vmatprep.subr.mxu0 0.0
    %750 = vmatpush2.xpose.msra.mxu0 0.0
    %751 = vmatprep.subr.mxu0 0.0
    %752 = vmatpush2.xpose.msra.mxu0 0.0
    %753 = vmatprep.subr.mxu0 0.0
    %754 = vmatpush2.xpose.msra.mxu0 0.0
    %755 = vmatprep.subr.mxu0 0.0
    %756 = vmatpush2.xpose.msra.mxu0 0.0
    %757 = vmatprep.subr.mxu0 0.0
    %758 = vmatpush2.xpose.msra.mxu0 0.0
    %759 = vmatprep.mubr.f32.mxu0 0.0
    %760 = vmatmul.mubr.f32.gmra.mxu0 %v687
    %v761 = vpop.f32.mrf.mxu0
    %v762 = vadd.f32 %v242, %v761
    %v763 = vpop.f32.mrf.mxu0
    %764 = vmatprep.mubr.f32.mxu0 0.0
    %765 = vmatmul.mubr.f32.gmra.mxu0 %v689
    %v766 = vpop.f32.mrf.mxu0
    %v767 = vadd.f32 %v243, %v766
    %v768 = vpop.f32.mrf.mxu0
    %769 = vdwg.mxu0
    %770 = vrot.lane.b32.xlu0 %v229, 96
    %v771 = vpop.permute.xlu0 %770
    %772 = vrot.lane.b32.xlu0 %v231, 96
    %v773 = vpop.permute.xlu0 %772
    %v774 = vsel %vm251, %v229, 0
    %v776 = vsel %vm251, %v231, 0
    %v778 = vsel %vm251, %v771, 0
    %v780 = vsel %vm251, %v773, 0
    %782 = vmatprep.subr.mxu0 0.0
    %783 = vmatpush1.xpose.msra.mxu0 0.0
    %784 = vmatprep.subr.mxu0 0.0
    %785 = vmatpush1.xpose.msra.mxu0 0.0
    %786 = vmatprep.subr.mxu0 0.0
    %787 = vmatpush1.xpose.msra.mxu0 0.0
    %788 = vmatprep.subr.mxu0 0.0
    %789 = vmatpush1.xpose.msra.mxu0 0.0
    %790 = vmatprep.subr.mxu0 0.0
    %791 = vmatpush1.xpose.msra.mxu0 0.0
    %792 = vmatprep.subr.mxu0 0.0
    %793 = vmatpush1.xpose.msra.mxu0 0.0
    %794 = vmatprep.subr.mxu0 0.0
    %795 = vmatpush1.xpose.msra.mxu0 0.0
    %796 = vmatprep.subr.mxu0 0.0
    %797 = vmatpush1.xpose.msra.mxu0 0.0
    %798 = vmatprep.subr.mxu0 0.0
    %799 = vmatpush1.xpose.msra.mxu0 0.0
    %800 = vmatprep.subr.mxu0 0.0
    %801 = vmatpush1.xpose.msra.mxu0 0.0
    %802 = vmatprep.subr.mxu0 0.0
    %803 = vmatpush1.xpose.msra.mxu0 0.0
    %804 = vmatprep.subr.mxu0 0.0
    %805 = vmatpush1.xpose.msra.mxu0 0.0
    %806 = vmatprep.subr.mxu0 0.0
    %807 = vmatpush1.xpose.msra.mxu0 0.0
    %808 = vmatprep.subr.mxu0 0.0
    %809 = vmatpush1.xpose.msra.mxu0 0.0
    %810 = vmatprep.subr.mxu0 0.0
    %811 = vmatpush1.xpose.msra.mxu0 %v780
    %812 = vmatprep.subr.mxu0 0.0
    %813 = vmatpush1.xpose.msra.mxu0 %v778
    %814 = vmatprep.subr.mxu0 0.0
    %815 = vmatpush2.xpose.msra.mxu0 0.0
    %816 = vmatprep.subr.mxu0 0.0
    %817 = vmatpush2.xpose.msra.mxu0 0.0
    %818 = vmatprep.subr.mxu0 0.0
    %819 = vmatpush2.xpose.msra.mxu0 0.0
    %820 = vmatprep.subr.mxu0 0.0
    %821 = vmatpush2.xpose.msra.mxu0 0.0
    %822 = vmatprep.subr.mxu0 0.0
    %823 = vmatpush2.xpose.msra.mxu0 0.0
    %824 = vmatprep.subr.mxu0 0.0
    %825 = vmatpush2.xpose.msra.mxu0 0.0
    %826 = vmatprep.subr.mxu0 0.0
    %827 = vmatpush2.xpose.msra.mxu0 0.0
    %828 = vmatprep.subr.mxu0 0.0
    %829 = vmatpush2.xpose.msra.mxu0 0.0
    %830 = vmatprep.subr.mxu0 0.0
    %831 = vmatpush2.xpose.msra.mxu0 0.0
    %832 = vmatprep.subr.mxu0 0.0
    %833 = vmatpush2.xpose.msra.mxu0 0.0
    %834 = vmatprep.subr.mxu0 0.0
    %835 = vmatpush2.xpose.msra.mxu0 0.0
    %836 = vmatprep.subr.mxu0 0.0
    %837 = vmatpush2.xpose.msra.mxu0 0.0
    %838 = vmatprep.subr.mxu0 0.0
    %839 = vmatpush2.xpose.msra.mxu0 0.0
    %840 = vmatprep.subr.mxu0 0.0
    %841 = vmatpush2.xpose.msra.mxu0 0.0
    %842 = vmatprep.subr.mxu0 0.0
    %843 = vmatpush2.xpose.msra.mxu0 0.0
    %844 = vmatprep.subr.mxu0 0.0
    %845 = vmatpush2.xpose.msra.mxu0 0.0
    %846 = vmatprep.mubr.f32.mxu0 0.0
    %847 = vmatmul.mubr.f32.gmra.mxu0 %v774
    %v848 = vpop.f32.mrf.mxu0
    %v849 = vadd.f32 %v245, %v848
    %v850 = vpop.f32.mrf.mxu0
    %851 = vmatprep.mubr.f32.mxu0 0.0
    %852 = vmatmul.mubr.f32.gmra.mxu0 %v776
    %v853 = vpop.f32.mrf.mxu0
    %v854 = vadd.f32 %v246, %v853
    %v855 = vpop.f32.mrf.mxu0
    %856 = vdwg.mxu0
    %857 = vrot.lane.b32.xlu0 %v233, 96
    %v858 = vpop.permute.xlu0 %857
    %859 = vrot.lane.b32.xlu0 %v235, 96
    %v860 = vpop.permute.xlu0 %859
    %v861 = vsel %vm251, %v233, 0
    %v863 = vsel %vm251, %v235, 0
    %v865 = vsel %vm251, %v858, 0
    %v867 = vsel %vm251, %v860, 0
    %869 = vmatprep.subr.mxu0 0.0
    %870 = vmatpush1.xpose.msra.mxu0 0.0
    %871 = vmatprep.subr.mxu0 0.0
    %872 = vmatpush1.xpose.msra.mxu0 0.0
    %873 = vmatprep.subr.mxu0 0.0
    %874 = vmatpush1.xpose.msra.mxu0 0.0
    %875 = vmatprep.subr.mxu0 0.0
    %876 = vmatpush1.xpose.msra.mxu0 0.0
    %877 = vmatprep.subr.mxu0 0.0
    %878 = vmatpush1.xpose.msra.mxu0 0.0
    %879 = vmatprep.subr.mxu0 0.0
    %880 = vmatpush1.xpose.msra.mxu0 0.0
    %881 = vmatprep.subr.mxu0 0.0
    %882 = vmatpush1.xpose.msra.mxu0 0.0
    %883 = vmatprep.subr.mxu0 0.0
    %884 = vmatpush1.xpose.msra.mxu0 0.0
    %885 = vmatprep.subr.mxu0 0.0
    %886 = vmatpush1.xpose.msra.mxu0 0.0
    %887 = vmatprep.subr.mxu0 0.0
    %888 = vmatpush1.xpose.msra.mxu0 0.0
    %889 = vmatprep.subr.mxu0 0.0
    %890 = vmatpush1.xpose.msra.mxu0 0.0
    %891 = vmatprep.subr.mxu0 0.0
    %892 = vmatpush1.xpose.msra.mxu0 0.0
    %893 = vmatprep.subr.mxu0 0.0
    %894 = vmatpush1.xpose.msra.mxu0 0.0
    %895 = vmatprep.subr.mxu0 0.0
    %896 = vmatpush1.xpose.msra.mxu0 0.0
    %897 = vmatprep.subr.mxu0 0.0
    %898 = vmatpush1.xpose.msra.mxu0 %v867
    %899 = vmatprep.subr.mxu0 0.0
    %900 = vmatpush1.xpose.msra.mxu0 %v865
    %901 = vmatprep.subr.mxu0 0.0
    %902 = vmatpush2.xpose.msra.mxu0 0.0
    %903 = vmatprep.subr.mxu0 0.0
    %904 = vmatpush2.xpose.msra.mxu0 0.0
    %905 = vmatprep.subr.mxu0 0.0
    %906 = vmatpush2.xpose.msra.mxu0 0.0
    %907 = vmatprep.subr.mxu0 0.0
    %908 = vmatpush2.xpose.msra.mxu0 0.0
    %909 = vmatprep.subr.mxu0 0.0
    %910 = vmatpush2.xpose.msra.mxu0 0.0
    %911 = vmatprep.subr.mxu0 0.0
    %912 = vmatpush2.xpose.msra.mxu0 0.0
    %913 = vmatprep.subr.mxu0 0.0
    %914 = vmatpush2.xpose.msra.mxu0 0.0
    %915 = vmatprep.subr.mxu0 0.0
    %916 = vmatpush2.xpose.msra.mxu0 0.0
    %917 = vmatprep.subr.mxu0 0.0
    %918 = vmatpush2.xpose.msra.mxu0 0.0
    %919 = vmatprep.subr.mxu0 0.0
    %920 = vmatpush2.xpose.msra.mxu0 0.0
    %921 = vmatprep.subr.mxu0 0.0
    %922 = vmatpush2.xpose.msra.mxu0 0.0
    %923 = vmatprep.subr.mxu0 0.0
    %924 = vmatpush2.xpose.msra.mxu0 0.0
    %925 = vmatprep.subr.mxu0 0.0
    %926 = vmatpush2.xpose.msra.mxu0 0.0
    %927 = vmatprep.subr.mxu0 0.0
    %928 = vmatpush2.xpose.msra.mxu0 0.0
    %929 = vmatprep.subr.mxu0 0.0
    %930 = vmatpush2.xpose.msra.mxu0 0.0
    %931 = vmatprep.subr.mxu0 0.0
    %932 = vmatpush2.xpose.msra.mxu0 0.0
    %933 = vmatprep.mubr.f32.mxu0 0.0
    %934 = vmatmul.mubr.f32.gmra.mxu0 %v861
    %v935 = vpop.f32.mrf.mxu0
    %v936 = vadd.f32 %v245, %v935
    %v937 = vpop.f32.mrf.mxu0
    %938 = vmatprep.mubr.f32.mxu0 0.0
    %939 = vmatmul.mubr.f32.gmra.mxu0 %v863
    %v940 = vpop.f32.mrf.mxu0
    %v941 = vadd.f32 %v246, %v940
    %v942 = vpop.f32.mrf.mxu0
    %943 = vdwg.mxu0
    %vm944 = vcmask 130048
    %v945 = vsel %vm944, %v327, -inf
    %946 = vmax.xlane.f32.xlu0 %v945
    %v947 = vpop.xlane.xlu0 %946
    %v948 = vsel %vm944, %v332, -inf
    %949 = vmax.xlane.f32.xlu0 %v948
    %v950 = vpop.xlane.xlu0 %949
    %v951 = vsel %vm944, %v414, -inf
    %952 = vmax.xlane.f32.xlu0 %v951
    %v953 = vpop.xlane.xlu0 %952
    %v954 = vsel %vm944, %v419, -inf
    %955 = vmax.xlane.f32.xlu0 %v954
    %v956 = vpop.xlane.xlu0 %955
    %v957 = vsel %vm944, %v501, -inf
    %958 = vmax.xlane.f32.xlu0 %v957
    %v959 = vpop.xlane.xlu0 %958
    %v960 = vsel %vm944, %v506, -inf
    %961 = vmax.xlane.f32.xlu0 %v960
    %v962 = vpop.xlane.xlu0 %961
    %v963 = vsel %vm944, %v588, -inf
    %964 = vmax.xlane.f32.xlu0 %v963
    %v965 = vpop.xlane.xlu0 %964
    %v966 = vsel %vm944, %v593, -inf
    %967 = vmax.xlane.f32.xlu0 %v966
    %v968 = vpop.xlane.xlu0 %967
    %v969 = vsel %vm944, %v675, -inf
    %970 = vmax.xlane.f32.xlu0 %v969
    %v971 = vpop.xlane.xlu0 %970
    %v972 = vsel %vm944, %v680, -inf
    %973 = vmax.xlane.f32.xlu0 %v972
    %v974 = vpop.xlane.xlu0 %973
    %v975 = vsel %vm944, %v762, -inf
    %976 = vmax.xlane.f32.xlu0 %v975
    %v977 = vpop.xlane.xlu0 %976
    %v978 = vsel %vm944, %v767, -inf
    %979 = vmax.xlane.f32.xlu0 %v978
    %v980 = vpop.xlane.xlu0 %979
    %v981 = vsel %vm944, %v849, -inf
    %982 = vmax.xlane.f32.xlu0 %v981
    %v983 = vpop.xlane.xlu0 %982
    %v984 = vsel %vm944, %v854, -inf
    %985 = vmax.xlane.f32.xlu0 %v984
    %v986 = vpop.xlane.xlu0 %985
    %v987 = vsel %vm944, %v936, -inf
    %988 = vmax.xlane.f32.xlu0 %v987
    %v989 = vpop.xlane.xlu0 %988
    %v990 = vsel %vm944, %v941, -inf
    %991 = vmax.xlane.f32.xlu0 %v990
    %v992 = vpop.xlane.xlu0 %991
    %v993 = vsub.f32 %v327, %v947
    %v994 = vsub.f32 %v332, %v950
    %v995 = vsub.f32 %v414, %v953
    %v996 = vsub.f32 %v419, %v956
    %v997 = vsub.f32 %v501, %v959
    %v998 = vsub.f32 %v506, %v962
    %v999 = vsub.f32 %v588, %v965
    %v1000 = vsub.f32 %v593, %v968
    %v1001 = vsub.f32 %v675, %v971
    %v1002 = vsub.f32 %v680, %v974
    %v1003 = vsub.f32 %v762, %v977
    %v1004 = vsub.f32 %v767, %v980
    %v1005 = vsub.f32 %v849, %v983
    %v1006 = vsub.f32 %v854, %v986
    %v1007 = vsub.f32 %v936, %v989
    %v1008 = vsub.f32 %v941, %v992
    %v1009 = vmul.f32 %v993, 1.442695
    %v1010 = vpow.pop %v1009
    %v1011 = vmul.f32 %v994, 1.442695
    %v1012 = vpow.pop %v1011
    %v1013 = vmul.f32 %v995, 1.442695
    %v1014 = vpow.pop %v1013
    %v1015 = vmul.f32 %v996, 1.442695
    %v1016 = vpow.pop %v1015
    %v1017 = vmul.f32 %v997, 1.442695
    %v1018 = vpow.pop %v1017
    %v1019 = vmul.f32 %v998, 1.442695
    %v1020 = vpow.pop %v1019
    %v1021 = vmul.f32 %v999, 1.442695
    %v1022 = vpow.pop %v1021
    %v1023 = vmul.f32 %v1000, 1.442695
    %v1024 = vpow.pop %v1023
    %v1025 = vmul.f32 %v1001, 1.442695
    %v1026 = vpow.pop %v1025
    %v1027 = vmul.f32 %v1002, 1.442695
    %v1028 = vpow.pop %v1027
    %v1029 = vmul.f32 %v1003, 1.442695
    %v1030 = vpow.pop %v1029
    %v1031 = vmul.f32 %v1004, 1.442695
    %v1032 = vpow.pop %v1031
    %v1033 = vmul.f32 %v1005, 1.442695
    %v1034 = vpow.pop %v1033
    %v1035 = vmul.f32 %v1006, 1.442695
    %v1036 = vpow.pop %v1035
    %v1037 = vmul.f32 %v1007, 1.442695
    %v1038 = vpow.pop %v1037
    %v1039 = vmul.f32 %v1008, 1.442695
    %v1040 = vpow.pop %v1039
    %v1041 = vsel %vm944, %v1010, 0.0
    %1042 = vadd.xlane.f32.xlu0 %v1041
    %v1043 = vpop.xlane.xlu0 %1042
    %v1044 = vsel %vm944, %v1012, 0.0
    %1045 = vadd.xlane.f32.xlu0 %v1044
    %v1046 = vpop.xlane.xlu0 %1045
    %v1047 = vsel %vm944, %v1014, 0.0
    %1048 = vadd.xlane.f32.xlu0 %v1047
    %v1049 = vpop.xlane.xlu0 %1048
    %v1050 = vsel %vm944, %v1016, 0.0
    %1051 = vadd.xlane.f32.xlu0 %v1050
    %v1052 = vpop.xlane.xlu0 %1051
    %v1053 = vsel %vm944, %v1018, 0.0
    %1054 = vadd.xlane.f32.xlu0 %v1053
    %v1055 = vpop.xlane.xlu0 %1054
    %v1056 = vsel %vm944, %v1020, 0.0
    %1057 = vadd.xlane.f32.xlu0 %v1056
    %v1058 = vpop.xlane.xlu0 %1057
    %v1059 = vsel %vm944, %v1022, 0.0
    %1060 = vadd.xlane.f32.xlu0 %v1059
    %v1061 = vpop.xlane.xlu0 %1060
    %v1062 = vsel %vm944, %v1024, 0.0
    %1063 = vadd.xlane.f32.xlu0 %v1062
    %v1064 = vpop.xlane.xlu0 %1063
    %v1065 = vsel %vm944, %v1026, 0.0
    %1066 = vadd.xlane.f32.xlu0 %v1065
    %v1067 = vpop.xlane.xlu0 %1066
    %v1068 = vsel %vm944, %v1028, 0.0
    %1069 = vadd.xlane.f32.xlu0 %v1068
    %v1070 = vpop.xlane.xlu0 %1069
    %v1071 = vsel %vm944, %v1030, 0.0
    %1072 = vadd.xlane.f32.xlu0 %v1071
    %v1073 = vpop.xlane.xlu0 %1072
    %v1074 = vsel %vm944, %v1032, 0.0
    %1075 = vadd.xlane.f32.xlu0 %v1074
    %v1076 = vpop.xlane.xlu0 %1075
    %v1077 = vsel %vm944, %v1034, 0.0
    %1078 = vadd.xlane.f32.xlu0 %v1077
    %v1079 = vpop.xlane.xlu0 %1078
    %v1080 = vsel %vm944, %v1036, 0.0
    %1081 = vadd.xlane.f32.xlu0 %v1080
    %v1082 = vpop.xlane.xlu0 %1081
    %v1083 = vsel %vm944, %v1038, 0.0
    %1084 = vadd.xlane.f32.xlu0 %v1083
    %v1085 = vpop.xlane.xlu0 %1084
    %v1086 = vsel %vm944, %v1040, 0.0
    %1087 = vadd.xlane.f32.xlu0 %v1086
    %v1088 = vpop.xlane.xlu0 %1087
    %v1089 = vrcp.pop %v1043
    %v1090 = vrcp.pop %v1046
    %v1091 = vrcp.pop %v1049
    %v1092 = vrcp.pop %v1052
    %v1093 = vrcp.pop %v1055
    %v1094 = vrcp.pop %v1058
    %v1095 = vrcp.pop %v1061
    %v1096 = vrcp.pop %v1064
    %v1097 = vrcp.pop %v1067
    %v1098 = vrcp.pop %v1070
    %v1099 = vrcp.pop %v1073
    %v1100 = vrcp.pop %v1076
    %v1101 = vrcp.pop %v1079
    %v1102 = vrcp.pop %v1082
    %v1103 = vrcp.pop %v1085
    %v1104 = vrcp.pop %v1088
    %v1105 = vmul.f32 %v1010, %v1089
    %v1106 = vmul.f32 %v1012, %v1090
    %v1107 = vmul.f32 %v1014, %v1091
    %v1108 = vmul.f32 %v1016, %v1092
    %v1109 = vmul.f32 %v1018, %v1093
    %v1110 = vmul.f32 %v1020, %v1094
    %v1111 = vmul.f32 %v1022, %v1095
    %v1112 = vmul.f32 %v1024, %v1096
    %v1113 = vmul.f32 %v1026, %v1097
    %v1114 = vmul.f32 %v1028, %v1098
    %v1115 = vmul.f32 %v1030, %v1099
    %v1116 = vmul.f32 %v1032, %v1100
    %v1117 = vmul.f32 %v1034, %v1101
    %v1118 = vmul.f32 %v1036, %v1102
    %v1119 = vmul.f32 %v1038, %v1103
    %v1120 = vmul.f32 %v1040, %v1104
    %1121 = vrot.lane.b32.xlu0 %v190, 64
    %v1122 = vpop.permute.xlu0 %1121
    %1123 = vrot.lane.b32.xlu0 %v195, 64
    %v1124 = vpop.permute.xlu0 %1123
    %v1128 = vsel %vm944, %v1105, 0
    %v1131 = vsel %vm944, %v1106, 0
    %1133 = vmatprep.subr.mxu0 0.0
    %1134 = vmatpush1.msra.mxu0 0.0
    %1135 = vmatprep.subr.mxu0 0.0
    %1136 = vmatpush1.msra.mxu0 0.0
    %1137 = vmatprep.subr.mxu0 0.0
    %1138 = vmatpush1.msra.mxu0 0.0
    %1139 = vmatprep.subr.mxu0 0.0
    %1140 = vmatpush1.msra.mxu0 0.0
    %1141 = vmatprep.subr.mxu0 0.0
    %1142 = vmatpush1.msra.mxu0 0.0
    %1143 = vmatprep.subr.mxu0 0.0
    %1144 = vmatpush1.msra.mxu0 0.0
    %1145 = vmatprep.subr.mxu0 0.0
    %1146 = vmatpush1.msra.mxu0 0.0
    %1147 = vmatprep.subr.mxu0 0.0
    %1148 = vmatpush1.msra.mxu0 0.0
    %1149 = vmatprep.subr.mxu0 0.0
    %1150 = vmatpush1.msra.mxu0 0.0
    %1151 = vmatprep.subr.mxu0 0.0
    %1152 = vmatpush1.msra.mxu0 0.0
    %1153 = vmatprep.subr.mxu0 0.0
    %1154 = vmatpush1.msra.mxu0 0.0
    %1155 = vmatprep.subr.mxu0 0.0
    %1156 = vmatpush1.msra.mxu0 0.0
    %1157 = vmatprep.subr.mxu0 0.0
    %1158 = vmatpush1.msra.mxu0 0.0
    %1159 = vmatprep.subr.mxu0 0.0
    %1160 = vmatpush1.msra.mxu0 0.0
    %1161 = vmatprep.subr.mxu0 0.0
    %1162 = vmatpush1.msra.mxu0 %v1124
    %1163 = vmatprep.subr.mxu0 0.0
    %1164 = vmatpush1.msra.mxu0 %v1122
    %1165 = vmatprep.subr.mxu0 0.0
    %1166 = vmatpush2.msra.mxu0 0.0
    %1167 = vmatprep.subr.mxu0 0.0
    %1168 = vmatpush2.msra.mxu0 0.0
    %1169 = vmatprep.subr.mxu0 0.0
    %1170 = vmatpush2.msra.mxu0 0.0
    %1171 = vmatprep.subr.mxu0 0.0
    %1172 = vmatpush2.msra.mxu0 0.0
    %1173 = vmatprep.subr.mxu0 0.0
    %1174 = vmatpush2.msra.mxu0 0.0
    %1175 = vmatprep.subr.mxu0 0.0
    %1176 = vmatpush2.msra.mxu0 0.0
    %1177 = vmatprep.subr.mxu0 0.0
    %1178 = vmatpush2.msra.mxu0 0.0
    %1179 = vmatprep.subr.mxu0 0.0
    %1180 = vmatpush2.msra.mxu0 0.0
    %1181 = vmatprep.subr.mxu0 0.0
    %1182 = vmatpush2.msra.mxu0 0.0
    %1183 = vmatprep.subr.mxu0 0.0
    %1184 = vmatpush2.msra.mxu0 0.0
    %1185 = vmatprep.subr.mxu0 0.0
    %1186 = vmatpush2.msra.mxu0 0.0
    %1187 = vmatprep.subr.mxu0 0.0
    %1188 = vmatpush2.msra.mxu0 0.0
    %1189 = vmatprep.subr.mxu0 0.0
    %1190 = vmatpush2.msra.mxu0 0.0
    %1191 = vmatprep.subr.mxu0 0.0
    %1192 = vmatpush2.msra.mxu0 0.0
    %1193 = vmatprep.subr.mxu0 0.0
    %1194 = vmatpush2.msra.mxu0 0.0
    %1195 = vmatprep.subr.mxu0 0.0
    %1196 = vmatpush2.msra.mxu0 0.0
    %1197 = vmatprep.mubr.f32.mxu0 0.0
    %1198 = vmatmul.mubr.f32.gmra.mxu0 %v1128
    %v1199 = vpop.f32.mrf.mxu0
    %v1200 = vadd.f32 0.0, %v1199
    %v1201 = vpop.f32.mrf.mxu0
    %1202 = vmatprep.mubr.f32.mxu0 0.0
    %1203 = vmatmul.mubr.f32.gmra.mxu0 %v1131
    %v1204 = vpop.f32.mrf.mxu0
    %v1205 = vadd.f32 0.0, %v1204
    %v1206 = vpop.f32.mrf.mxu0
    %1207 = vdwg.mxu0
    %1208 = vrot.lane.b32.xlu0 %v200, 64
    %v1209 = vpop.permute.xlu0 %1208
    %1210 = vrot.lane.b32.xlu0 %v205, 64
    %v1211 = vpop.permute.xlu0 %1210
    %v1215 = vsel %vm944, %v1107, 0
    %v1218 = vsel %vm944, %v1108, 0
    %1220 = vmatprep.subr.mxu0 0.0
    %1221 = vmatpush1.msra.mxu0 0.0
    %1222 = vmatprep.subr.mxu0 0.0
    %1223 = vmatpush1.msra.mxu0 0.0
    %1224 = vmatprep.subr.mxu0 0.0
    %1225 = vmatpush1.msra.mxu0 0.0
    %1226 = vmatprep.subr.mxu0 0.0
    %1227 = vmatpush1.msra.mxu0 0.0
    %1228 = vmatprep.subr.mxu0 0.0
    %1229 = vmatpush1.msra.mxu0 0.0
    %1230 = vmatprep.subr.mxu0 0.0
    %1231 = vmatpush1.msra.mxu0 0.0
    %1232 = vmatprep.subr.mxu0 0.0
    %1233 = vmatpush1.msra.mxu0 0.0
    %1234 = vmatprep.subr.mxu0 0.0
    %1235 = vmatpush1.msra.mxu0 0.0
    %1236 = vmatprep.subr.mxu0 0.0
    %1237 = vmatpush1.msra.mxu0 0.0
    %1238 = vmatprep.subr.mxu0 0.0
    %1239 = vmatpush1.msra.mxu0 0.0
    %1240 = vmatprep.subr.mxu0 0.0
    %1241 = vmatpush1.msra.mxu0 0.0
    %1242 = vmatprep.subr.mxu0 0.0
    %1243 = vmatpush1.msra.mxu0 0.0
    %1244 = vmatprep.subr.mxu0 0.0
    %1245 = vmatpush1.msra.mxu0 0.0
    %1246 = vmatprep.subr.mxu0 0.0
    %1247 = vmatpush1.msra.mxu0 0.0
    %1248 = vmatprep.subr.mxu0 0.0
    %1249 = vmatpush1.msra.mxu0 %v1211
    %1250 = vmatprep.subr.mxu0 0.0
    %1251 = vmatpush1.msra.mxu0 %v1209
    %1252 = vmatprep.subr.mxu0 0.0
    %1253 = vmatpush2.msra.mxu0 0.0
    %1254 = vmatprep.subr.mxu0 0.0
    %1255 = vmatpush2.msra.mxu0 0.0
    %1256 = vmatprep.subr.mxu0 0.0
    %1257 = vmatpush2.msra.mxu0 0.0
    %1258 = vmatprep.subr.mxu0 0.0
    %1259 = vmatpush2.msra.mxu0 0.0
    %1260 = vmatprep.subr.mxu0 0.0
    %1261 = vmatpush2.msra.mxu0 0.0
    %1262 = vmatprep.subr.mxu0 0.0
    %1263 = vmatpush2.msra.mxu0 0.0
    %1264 = vmatprep.subr.mxu0 0.0
    %1265 = vmatpush2.msra.mxu0 0.0
    %1266 = vmatprep.subr.mxu0 0.0
    %1267 = vmatpush2.msra.mxu0 0.0
    %1268 = vmatprep.subr.mxu0 0.0
    %1269 = vmatpush2.msra.mxu0 0.0
    %1270 = vmatprep.subr.mxu0 0.0
    %1271 = vmatpush2.msra.mxu0 0.0
    %1272 = vmatprep.subr.mxu0 0.0
    %1273 = vmatpush2.msra.mxu0 0.0
    %1274 = vmatprep.subr.mxu0 0.0
    %1275 = vmatpush2.msra.mxu0 0.0
    %1276 = vmatprep.subr.mxu0 0.0
    %1277 = vmatpush2.msra.mxu0 0.0
    %1278 = vmatprep.subr.mxu0 0.0
    %1279 = vmatpush2.msra.mxu0 0.0
    %1280 = vmatprep.subr.mxu0 0.0
    %1281 = vmatpush2.msra.mxu0 0.0
    %1282 = vmatprep.subr.mxu0 0.0
    %1283 = vmatpush2.msra.mxu0 0.0
    %1284 = vmatprep.mubr.f32.mxu0 0.0
    %1285 = vmatmul.mubr.f32.gmra.mxu0 %v1215
    %v1286 = vpop.f32.mrf.mxu0
    %v1287 = vadd.f32 0.0, %v1286
    %v1288 = vpop.f32.mrf.mxu0
    %1289 = vmatprep.mubr.f32.mxu0 0.0
    %1290 = vmatmul.mubr.f32.gmra.mxu0 %v1218
    %v1291 = vpop.f32.mrf.mxu0
    %v1292 = vadd.f32 0.0, %v1291
    %v1293 = vpop.f32.mrf.mxu0
    %1294 = vdwg.mxu0
    %1295 = vrot.lane.b32.xlu0 %v213, 64
    %v1296 = vpop.permute.xlu0 %1295
    %1297 = vrot.lane.b32.xlu0 %v215, 64
    %v1298 = vpop.permute.xlu0 %1297
    %v1302 = vsel %vm944, %v1109, 0
    %v1305 = vsel %vm944, %v1110, 0
    %1307 = vmatprep.subr.mxu0 0.0
    %1308 = vmatpush1.msra.mxu0 0.0
    %1309 = vmatprep.subr.mxu0 0.0
    %1310 = vmatpush1.msra.mxu0 0.0
    %1311 = vmatprep.subr.mxu0 0.0
    %1312 = vmatpush1.msra.mxu0 0.0
    %1313 = vmatprep.subr.mxu0 0.0
    %1314 = vmatpush1.msra.mxu0 0.0
    %1315 = vmatprep.subr.mxu0 0.0
    %1316 = vmatpush1.msra.mxu0 0.0
    %1317 = vmatprep.subr.mxu0 0.0
    %1318 = vmatpush1.msra.mxu0 0.0
    %1319 = vmatprep.subr.mxu0 0.0
    %1320 = vmatpush1.msra.mxu0 0.0
    %1321 = vmatprep.subr.mxu0 0.0
    %1322 = vmatpush1.msra.mxu0 0.0
    %1323 = vmatprep.subr.mxu0 0.0
    %1324 = vmatpush1.msra.mxu0 0.0
    %1325 = vmatprep.subr.mxu0 0.0
    %1326 = vmatpush1.msra.mxu0 0.0
    %1327 = vmatprep.subr.mxu0 0.0
    %1328 = vmatpush1.msra.mxu0 0.0
    %1329 = vmatprep.subr.mxu0 0.0
    %1330 = vmatpush1.msra.mxu0 0.0
    %1331 = vmatprep.subr.mxu0 0.0
    %1332 = vmatpush1.msra.mxu0 0.0
    %1333 = vmatprep.subr.mxu0 0.0
    %1334 = vmatpush1.msra.mxu0 0.0
    %1335 = vmatprep.subr.mxu0 0.0
    %1336 = vmatpush1.msra.mxu0 %v1298
    %1337 = vmatprep.subr.mxu0 0.0
    %1338 = vmatpush1.msra.mxu0 %v1296
    %1339 = vmatprep.subr.mxu0 0.0
    %1340 = vmatpush2.msra.mxu0 0.0
    %1341 = vmatprep.subr.mxu0 0.0
    %1342 = vmatpush2.msra.mxu0 0.0
    %1343 = vmatprep.subr.mxu0 0.0
    %1344 = vmatpush2.msra.mxu0 0.0
    %1345 = vmatprep.subr.mxu0 0.0
    %1346 = vmatpush2.msra.mxu0 0.0
    %1347 = vmatprep.subr.mxu0 0.0
    %1348 = vmatpush2.msra.mxu0 0.0
    %1349 = vmatprep.subr.mxu0 0.0
    %1350 = vmatpush2.msra.mxu0 0.0
    %1351 = vmatprep.subr.mxu0 0.0
    %1352 = vmatpush2.msra.mxu0 0.0
    %1353 = vmatprep.subr.mxu0 0.0
    %1354 = vmatpush2.msra.mxu0 0.0
    %1355 = vmatprep.subr.mxu0 0.0
    %1356 = vmatpush2.msra.mxu0 0.0
    %1357 = vmatprep.subr.mxu0 0.0
    %1358 = vmatpush2.msra.mxu0 0.0
    %1359 = vmatprep.subr.mxu0 0.0
    %1360 = vmatpush2.msra.mxu0 0.0
    %1361 = vmatprep.subr.mxu0 0.0
    %1362 = vmatpush2.msra.mxu0 0.0
    %1363 = vmatprep.subr.mxu0 0.0
    %1364 = vmatpush2.msra.mxu0 0.0
    %1365 = vmatprep.subr.mxu0 0.0
    %1366 = vmatpush2.msra.mxu0 0.0
    %1367 = vmatprep.subr.mxu0 0.0
    %1368 = vmatpush2.msra.mxu0 0.0
    %1369 = vmatprep.subr.mxu0 0.0
    %1370 = vmatpush2.msra.mxu0 0.0
    %1371 = vmatprep.mubr.f32.mxu0 0.0
    %1372 = vmatmul.mubr.f32.gmra.mxu0 %v1302
    %v1373 = vpop.f32.mrf.mxu0
    %v1374 = vadd.f32 0.0, %v1373
    %v1375 = vpop.f32.mrf.mxu0
    %1376 = vmatprep.mubr.f32.mxu0 0.0
    %1377 = vmatmul.mubr.f32.gmra.mxu0 %v1305
    %v1378 = vpop.f32.mrf.mxu0
    %v1379 = vadd.f32 0.0, %v1378
    %v1380 = vpop.f32.mrf.mxu0
    %1381 = vdwg.mxu0
    %1382 = vrot.lane.b32.xlu0 %v217, 64
    %v1383 = vpop.permute.xlu0 %1382
    %1384 = vrot.lane.b32.xlu0 %v219, 64
    %v1385 = vpop.permute.xlu0 %1384
    %v1389 = vsel %vm944, %v1111, 0
    %v1392 = vsel %vm944, %v1112, 0
    %1394 = vmatprep.subr.mxu0 0.0
    %1395 = vmatpush1.msra.mxu0 0.0
    %1396 = vmatprep.subr.mxu0 0.0
    %1397 = vmatpush1.msra.mxu0 0.0
    %1398 = vmatprep.subr.mxu0 0.0
    %1399 = vmatpush1.msra.mxu0 0.0
    %1400 = vmatprep.subr.mxu0 0.0
    %1401 = vmatpush1.msra.mxu0 0.0
    %1402 = vmatprep.subr.mxu0 0.0
    %1403 = vmatpush1.msra.mxu0 0.0
    %1404 = vmatprep.subr.mxu0 0.0
    %1405 = vmatpush1.msra.mxu0 0.0
    %1406 = vmatprep.subr.mxu0 0.0
    %1407 = vmatpush1.msra.mxu0 0.0
    %1408 = vmatprep.subr.mxu0 0.0
    %1409 = vmatpush1.msra.mxu0 0.0
    %1410 = vmatprep.subr.mxu0 0.0
    %1411 = vmatpush1.msra.mxu0 0.0
    %1412 = vmatprep.subr.mxu0 0.0
    %1413 = vmatpush1.msra.mxu0 0.0
    %1414 = vmatprep.subr.mxu0 0.0
    %1415 = vmatpush1.msra.mxu0 0.0
    %1416 = vmatprep.subr.mxu0 0.0
    %1417 = vmatpush1.msra.mxu0 0.0
    %1418 = vmatprep.subr.mxu0 0.0
    %1419 = vmatpush1.msra.mxu0 0.0
    %1420 = vmatprep.subr.mxu0 0.0
    %1421 = vmatpush1.msra.mxu0 0.0
    %1422 = vmatprep.subr.mxu0 0.0
    %1423 = vmatpush1.msra.mxu0 %v1385
    %1424 = vmatprep.subr.mxu0 0.0
    %1425 = vmatpush1.msra.mxu0 %v1383
    %1426 = vmatprep.subr.mxu0 0.0
    %1427 = vmatpush2.msra.mxu0 0.0
    %1428 = vmatprep.subr.mxu0 0.0
    %1429 = vmatpush2.msra.mxu0 0.0
    %1430 = vmatprep.subr.mxu0 0.0
    %1431 = vmatpush2.msra.mxu0 0.0
    %1432 = vmatprep.subr.mxu0 0.0
    %1433 = vmatpush2.msra.mxu0 0.0
    %1434 = vmatprep.subr.mxu0 0.0
    %1435 = vmatpush2.msra.mxu0 0.0
    %1436 = vmatprep.subr.mxu0 0.0
    %1437 = vmatpush2.msra.mxu0 0.0
    %1438 = vmatprep.subr.mxu0 0.0
    %1439 = vmatpush2.msra.mxu0 0.0
    %1440 = vmatprep.subr.mxu0 0.0
    %1441 = vmatpush2.msra.mxu0 0.0
    %1442 = vmatprep.subr.mxu0 0.0
    %1443 = vmatpush2.msra.mxu0 0.0
    %1444 = vmatprep.subr.mxu0 0.0
    %1445 = vmatpush2.msra.mxu0 0.0
    %1446 = vmatprep.subr.mxu0 0.0
    %1447 = vmatpush2.msra.mxu0 0.0
    %1448 = vmatprep.subr.mxu0 0.0
    %1449 = vmatpush2.msra.mxu0 0.0
    %1450 = vmatprep.subr.mxu0 0.0
    %1451 = vmatpush2.msra.mxu0 0.0
    %1452 = vmatprep.subr.mxu0 0.0
    %1453 = vmatpush2.msra.mxu0 0.0
    %1454 = vmatprep.subr.mxu0 0.0
    %1455 = vmatpush2.msra.mxu0 0.0
    %1456 = vmatprep.subr.mxu0 0.0
    %1457 = vmatpush2.msra.mxu0 0.0
    %1458 = vmatprep.mubr.f32.mxu0 0.0
    %1459 = vmatmul.mubr.f32.gmra.mxu0 %v1389
    %v1460 = vpop.f32.mrf.mxu0
    %v1461 = vadd.f32 0.0, %v1460
    %v1462 = vpop.f32.mrf.mxu0
    %1463 = vmatprep.mubr.f32.mxu0 0.0
    %1464 = vmatmul.mubr.f32.gmra.mxu0 %v1392
    %v1465 = vpop.f32.mrf.mxu0
    %v1466 = vadd.f32 0.0, %v1465
    %v1467 = vpop.f32.mrf.mxu0
    %1468 = vdwg.mxu0
    %1469 = vrot.lane.b32.xlu0 %v221, 64
    %v1470 = vpop.permute.xlu0 %1469
    %1471 = vrot.lane.b32.xlu0 %v223, 64
    %v1472 = vpop.permute.xlu0 %1471
    %v1476 = vsel %vm944, %v1113, 0
    %v1479 = vsel %vm944, %v1114, 0
    %1481 = vmatprep.subr.mxu0 0.0
    %1482 = vmatpush1.msra.mxu0 0.0
    %1483 = vmatprep.subr.mxu0 0.0
    %1484 = vmatpush1.msra.mxu0 0.0
    %1485 = vmatprep.subr.mxu0 0.0
    %1486 = vmatpush1.msra.mxu0 0.0
    %1487 = vmatprep.subr.mxu0 0.0
    %1488 = vmatpush1.msra.mxu0 0.0
    %1489 = vmatprep.subr.mxu0 0.0
    %1490 = vmatpush1.msra.mxu0 0.0
    %1491 = vmatprep.subr.mxu0 0.0
    %1492 = vmatpush1.msra.mxu0 0.0
    %1493 = vmatprep.subr.mxu0 0.0
    %1494 = vmatpush1.msra.mxu0 0.0
    %1495 = vmatprep.subr.mxu0 0.0
    %1496 = vmatpush1.msra.mxu0 0.0
    %1497 = vmatprep.subr.mxu0 0.0
    %1498 = vmatpush1.msra.mxu0 0.0
    %1499 = vmatprep.subr.mxu0 0.0
    %1500 = vmatpush1.msra.mxu0 0.0
    %1501 = vmatprep.subr.mxu0 0.0
    %1502 = vmatpush1.msra.mxu0 0.0
    %1503 = vmatprep.subr.mxu0 0.0
    %1504 = vmatpush1.msra.mxu0 0.0
    %1505 = vmatprep.subr.mxu0 0.0
    %1506 = vmatpush1.msra.mxu0 0.0
    %1507 = vmatprep.subr.mxu0 0.0
    %1508 = vmatpush1.msra.mxu0 0.0
    %1509 = vmatprep.subr.mxu0 0.0
    %1510 = vmatpush1.msra.mxu0 %v1472
    %1511 = vmatprep.subr.mxu0 0.0
    %1512 = vmatpush1.msra.mxu0 %v1470
    %1513 = vmatprep.subr.mxu0 0.0
    %1514 = vmatpush2.msra.mxu0 0.0
    %1515 = vmatprep.subr.mxu0 0.0
    %1516 = vmatpush2.msra.mxu0 0.0
    %1517 = vmatprep.subr.mxu0 0.0
    %1518 = vmatpush2.msra.mxu0 0.0
    %1519 = vmatprep.subr.mxu0 0.0
    %1520 = vmatpush2.msra.mxu0 0.0
    %1521 = vmatprep.subr.mxu0 0.0
    %1522 = vmatpush2.msra.mxu0 0.0
    %1523 = vmatprep.subr.mxu0 0.0
    %1524 = vmatpush2.msra.mxu0 0.0
    %1525 = vmatprep.subr.mxu0 0.0
    %1526 = vmatpush2.msra.mxu0 0.0
    %1527 = vmatprep.subr.mxu0 0.0
    %1528 = vmatpush2.msra.mxu0 0.0
    %1529 = vmatprep.subr.mxu0 0.0
    %1530 = vmatpush2.msra.mxu0 0.0
    %1531 = vmatprep.subr.mxu0 0.0
    %1532 = vmatpush2.msra.mxu0 0.0
    %1533 = vmatprep.subr.mxu0 0.0
    %1534 = vmatpush2.msra.mxu0 0.0
    %1535 = vmatprep.subr.mxu0 0.0
    %1536 = vmatpush2.msra.mxu0 0.0
    %1537 = vmatprep.subr.mxu0 0.0
    %1538 = vmatpush2.msra.mxu0 0.0
    %1539 = vmatprep.subr.mxu0 0.0
    %1540 = vmatpush2.msra.mxu0 0.0
    %1541 = vmatprep.subr.mxu0 0.0
    %1542 = vmatpush2.msra.mxu0 0.0
    %1543 = vmatprep.subr.mxu0 0.0
    %1544 = vmatpush2.msra.mxu0 0.0
    %1545 = vmatprep.mubr.f32.mxu0 0.0
    %1546 = vmatmul.mubr.f32.gmra.mxu0 %v1476
    %v1547 = vpop.f32.mrf.mxu0
    %v1548 = vadd.f32 0.0, %v1547
    %v1549 = vpop.f32.mrf.mxu0
    %1550 = vmatprep.mubr.f32.mxu0 0.0
    %1551 = vmatmul.mubr.f32.gmra.mxu0 %v1479
    %v1552 = vpop.f32.mrf.mxu0
    %v1553 = vadd.f32 0.0, %v1552
    %v1554 = vpop.f32.mrf.mxu0
    %1555 = vdwg.mxu0
    %1556 = vrot.lane.b32.xlu0 %v225, 64
    %v1557 = vpop.permute.xlu0 %1556
    %1558 = vrot.lane.b32.xlu0 %v227, 64
    %v1559 = vpop.permute.xlu0 %1558
    %v1563 = vsel %vm944, %v1115, 0
    %v1566 = vsel %vm944, %v1116, 0
    %1568 = vmatprep.subr.mxu0 0.0
    %1569 = vmatpush1.msra.mxu0 0.0
    %1570 = vmatprep.subr.mxu0 0.0
    %1571 = vmatpush1.msra.mxu0 0.0
    %1572 = vmatprep.subr.mxu0 0.0
    %1573 = vmatpush1.msra.mxu0 0.0
    %1574 = vmatprep.subr.mxu0 0.0
    %1575 = vmatpush1.msra.mxu0 0.0
    %1576 = vmatprep.subr.mxu0 0.0
    %1577 = vmatpush1.msra.mxu0 0.0
    %1578 = vmatprep.subr.mxu0 0.0
    %1579 = vmatpush1.msra.mxu0 0.0
    %1580 = vmatprep.subr.mxu0 0.0
    %1581 = vmatpush1.msra.mxu0 0.0
    %1582 = vmatprep.subr.mxu0 0.0
    %1583 = vmatpush1.msra.mxu0 0.0
    %1584 = vmatprep.subr.mxu0 0.0
    %1585 = vmatpush1.msra.mxu0 0.0
    %1586 = vmatprep.subr.mxu0 0.0
    %1587 = vmatpush1.msra.mxu0 0.0
    %1588 = vmatprep.subr.mxu0 0.0
    %1589 = vmatpush1.msra.mxu0 0.0
    %1590 = vmatprep.subr.mxu0 0.0
    %1591 = vmatpush1.msra.mxu0 0.0
    %1592 = vmatprep.subr.mxu0 0.0
    %1593 = vmatpush1.msra.mxu0 0.0
    %1594 = vmatprep.subr.mxu0 0.0
    %1595 = vmatpush1.msra.mxu0 0.0
    %1596 = vmatprep.subr.mxu0 0.0
    %1597 = vmatpush1.msra.mxu0 %v1559
    %1598 = vmatprep.subr.mxu0 0.0
    %1599 = vmatpush1.msra.mxu0 %v1557
    %1600 = vmatprep.subr.mxu0 0.0
    %1601 = vmatpush2.msra.mxu0 0.0
    %1602 = vmatprep.subr.mxu0 0.0
    %1603 = vmatpush2.msra.mxu0 0.0
    %1604 = vmatprep.subr.mxu0 0.0
    %1605 = vmatpush2.msra.mxu0 0.0
    %1606 = vmatprep.subr.mxu0 0.0
    %1607 = vmatpush2.msra.mxu0 0.0
    %1608 = vmatprep.subr.mxu0 0.0
    %1609 = vmatpush2.msra.mxu0 0.0
    %1610 = vmatprep.subr.mxu0 0.0
    %1611 = vmatpush2.msra.mxu0 0.0
    %1612 = vmatprep.subr.mxu0 0.0
    %1613 = vmatpush2.msra.mxu0 0.0
    %1614 = vmatprep.subr.mxu0 0.0
    %1615 = vmatpush2.msra.mxu0 0.0
    %1616 = vmatprep.subr.mxu0 0.0
    %1617 = vmatpush2.msra.mxu0 0.0
    %1618 = vmatprep.subr.mxu0 0.0
    %1619 = vmatpush2.msra.mxu0 0.0
    %1620 = vmatprep.subr.mxu0 0.0
    %1621 = vmatpush2.msra.mxu0 0.0
    %1622 = vmatprep.subr.mxu0 0.0
    %1623 = vmatpush2.msra.mxu0 0.0
    %1624 = vmatprep.subr.mxu0 0.0
    %1625 = vmatpush2.msra.mxu0 0.0
    %1626 = vmatprep.subr.mxu0 0.0
    %1627 = vmatpush2.msra.mxu0 0.0
    %1628 = vmatprep.subr.mxu0 0.0
    %1629 = vmatpush2.msra.mxu0 0.0
    %1630 = vmatprep.subr.mxu0 0.0
    %1631 = vmatpush2.msra.mxu0 0.0
    %1632 = vmatprep.mubr.f32.mxu0 0.0
    %1633 = vmatmul.mubr.f32.gmra.mxu0 %v1563
    %v1634 = vpop.f32.mrf.mxu0
    %v1635 = vadd.f32 0.0, %v1634
    %v1636 = vpop.f32.mrf.mxu0
    %1637 = vmatprep.mubr.f32.mxu0 0.0
    %1638 = vmatmul.mubr.f32.gmra.mxu0 %v1566
    %v1639 = vpop.f32.mrf.mxu0
    %v1640 = vadd.f32 0.0, %v1639
    %v1641 = vpop.f32.mrf.mxu0
    %1642 = vdwg.mxu0
    %1643 = vrot.lane.b32.xlu0 %v229, 64
    %v1644 = vpop.permute.xlu0 %1643
    %1645 = vrot.lane.b32.xlu0 %v231, 64
    %v1646 = vpop.permute.xlu0 %1645
    %v1650 = vsel %vm944, %v1117, 0
    %v1653 = vsel %vm944, %v1118, 0
    %1655 = vmatprep.subr.mxu0 0.0
    %1656 = vmatpush1.msra.mxu0 0.0
    %1657 = vmatprep.subr.mxu0 0.0
    %1658 = vmatpush1.msra.mxu0 0.0
    %1659 = vmatprep.subr.mxu0 0.0
    %1660 = vmatpush1.msra.mxu0 0.0
    %1661 = vmatprep.subr.mxu0 0.0
    %1662 = vmatpush1.msra.mxu0 0.0
    %1663 = vmatprep.subr.mxu0 0.0
    %1664 = vmatpush1.msra.mxu0 0.0
    %1665 = vmatprep.subr.mxu0 0.0
    %1666 = vmatpush1.msra.mxu0 0.0
    %1667 = vmatprep.subr.mxu0 0.0
    %1668 = vmatpush1.msra.mxu0 0.0
    %1669 = vmatprep.subr.mxu0 0.0
    %1670 = vmatpush1.msra.mxu0 0.0
    %1671 = vmatprep.subr.mxu0 0.0
    %1672 = vmatpush1.msra.mxu0 0.0
    %1673 = vmatprep.subr.mxu0 0.0
    %1674 = vmatpush1.msra.mxu0 0.0
    %1675 = vmatprep.subr.mxu0 0.0
    %1676 = vmatpush1.msra.mxu0 0.0
    %1677 = vmatprep.subr.mxu0 0.0
    %1678 = vmatpush1.msra.mxu0 0.0
    %1679 = vmatprep.subr.mxu0 0.0
    %1680 = vmatpush1.msra.mxu0 0.0
    %1681 = vmatprep.subr.mxu0 0.0
    %1682 = vmatpush1.msra.mxu0 0.0
    %1683 = vmatprep.subr.mxu0 0.0
    %1684 = vmatpush1.msra.mxu0 %v1646
    %1685 = vmatprep.subr.mxu0 0.0
    %1686 = vmatpush1.msra.mxu0 %v1644
    %1687 = vmatprep.subr.mxu0 0.0
    %1688 = vmatpush2.msra.mxu0 0.0
    %1689 = vmatprep.subr.mxu0 0.0
    %1690 = vmatpush2.msra.mxu0 0.0
    %1691 = vmatprep.subr.mxu0 0.0
    %1692 = vmatpush2.msra.mxu0 0.0
    %1693 = vmatprep.subr.mxu0 0.0
    %1694 = vmatpush2.msra.mxu0 0.0
    %1695 = vmatprep.subr.mxu0 0.0
    %1696 = vmatpush2.msra.mxu0 0.0
    %1697 = vmatprep.subr.mxu0 0.0
    %1698 = vmatpush2.msra.mxu0 0.0
    %1699 = vmatprep.subr.mxu0 0.0
    %1700 = vmatpush2.msra.mxu0 0.0
    %1701 = vmatprep.subr.mxu0 0.0
    %1702 = vmatpush2.msra.mxu0 0.0
    %1703 = vmatprep.subr.mxu0 0.0
    %1704 = vmatpush2.msra.mxu0 0.0
    %1705 = vmatprep.subr.mxu0 0.0
    %1706 = vmatpush2.msra.mxu0 0.0
    %1707 = vmatprep.subr.mxu0 0.0
    %1708 = vmatpush2.msra.mxu0 0.0
    %1709 = vmatprep.subr.mxu0 0.0
    %1710 = vmatpush2.msra.mxu0 0.0
    %1711 = vmatprep.subr.mxu0 0.0
    %1712 = vmatpush2.msra.mxu0 0.0
    %1713 = vmatprep.subr.mxu0 0.0
    %1714 = vmatpush2.msra.mxu0 0.0
    %1715 = vmatprep.subr.mxu0 0.0
    %1716 = vmatpush2.msra.mxu0 0.0
    %1717 = vmatprep.subr.mxu0 0.0
    %1718 = vmatpush2.msra.mxu0 0.0
    %1719 = vmatprep.mubr.f32.mxu0 0.0
    %1720 = vmatmul.mubr.f32.gmra.mxu0 %v1650
    %v1721 = vpop.f32.mrf.mxu0
    %v1722 = vadd.f32 0.0, %v1721
    %v1723 = vpop.f32.mrf.mxu0
    %1724 = vmatprep.mubr.f32.mxu0 0.0
    %1725 = vmatmul.mubr.f32.gmra.mxu0 %v1653
    %v1726 = vpop.f32.mrf.mxu0
    %v1727 = vadd.f32 0.0, %v1726
    %v1728 = vpop.f32.mrf.mxu0
    %1729 = vdwg.mxu0
    %1730 = vrot.lane.b32.xlu0 %v233, 64
    %v1731 = vpop.permute.xlu0 %1730
    %1732 = vrot.lane.b32.xlu0 %v235, 64
    %v1733 = vpop.permute.xlu0 %1732
    %v1737 = vsel %vm944, %v1119, 0
    %v1740 = vsel %vm944, %v1120, 0
    %1742 = vmatprep.subr.mxu0 0.0
    %1743 = vmatpush1.msra.mxu0 0.0
    %1744 = vmatprep.subr.mxu0 0.0
    %1745 = vmatpush1.msra.mxu0 0.0
    %1746 = vmatprep.subr.mxu0 0.0
    %1747 = vmatpush1.msra.mxu0 0.0
    %1748 = vmatprep.subr.mxu0 0.0
    %1749 = vmatpush1.msra.mxu0 0.0
    %1750 = vmatprep.subr.mxu0 0.0
    %1751 = vmatpush1.msra.mxu0 0.0
    %1752 = vmatprep.subr.mxu0 0.0
    %1753 = vmatpush1.msra.mxu0 0.0
    %1754 = vmatprep.subr.mxu0 0.0
    %1755 = vmatpush1.msra.mxu0 0.0
    %1756 = vmatprep.subr.mxu0 0.0
    %1757 = vmatpush1.msra.mxu0 0.0
    %1758 = vmatprep.subr.mxu0 0.0
    %1759 = vmatpush1.msra.mxu0 0.0
    %1760 = vmatprep.subr.mxu0 0.0
    %1761 = vmatpush1.msra.mxu0 0.0
    %1762 = vmatprep.subr.mxu0 0.0
    %1763 = vmatpush1.msra.mxu0 0.0
    %1764 = vmatprep.subr.mxu0 0.0
    %1765 = vmatpush1.msra.mxu0 0.0
    %1766 = vmatprep.subr.mxu0 0.0
    %1767 = vmatpush1.msra.mxu0 0.0
    %1768 = vmatprep.subr.mxu0 0.0
    %1769 = vmatpush1.msra.mxu0 0.0
    %1770 = vmatprep.subr.mxu0 0.0
    %1771 = vmatpush1.msra.mxu0 %v1733
    %1772 = vmatprep.subr.mxu0 0.0
    %1773 = vmatpush1.msra.mxu0 %v1731
    %1774 = vmatprep.subr.mxu0 0.0
    %1775 = vmatpush2.msra.mxu0 0.0
    %1776 = vmatprep.subr.mxu0 0.0
    %1777 = vmatpush2.msra.mxu0 0.0
    %1778 = vmatprep.subr.mxu0 0.0
    %1779 = vmatpush2.msra.mxu0 0.0
    %1780 = vmatprep.subr.mxu0 0.0
    %1781 = vmatpush2.msra.mxu0 0.0
    %1782 = vmatprep.subr.mxu0 0.0
    %1783 = vmatpush2.msra.mxu0 0.0
    %1784 = vmatprep.subr.mxu0 0.0
    %1785 = vmatpush2.msra.mxu0 0.0
    %1786 = vmatprep.subr.mxu0 0.0
    %1787 = vmatpush2.msra.mxu0 0.0
    %1788 = vmatprep.subr.mxu0 0.0
    %1789 = vmatpush2.msra.mxu0 0.0
    %1790 = vmatprep.subr.mxu0 0.0
    %1791 = vmatpush2.msra.mxu0 0.0
    %1792 = vmatprep.subr.mxu0 0.0
    %1793 = vmatpush2.msra.mxu0 0.0
    %1794 = vmatprep.subr.mxu0 0.0
    %1795 = vmatpush2.msra.mxu0 0.0
    %1796 = vmatprep.subr.mxu0 0.0
    %1797 = vmatpush2.msra.mxu0 0.0
    %1798 = vmatprep.subr.mxu0 0.0
    %1799 = vmatpush2.msra.mxu0 0.0
    %1800 = vmatprep.subr.mxu0 0.0
    %1801 = vmatpush2.msra.mxu0 0.0
    %1802 = vmatprep.subr.mxu0 0.0
    %1803 = vmatpush2.msra.mxu0 0.0
    %1804 = vmatprep.subr.mxu0 0.0
    %1805 = vmatpush2.msra.mxu0 0.0
    %1806 = vmatprep.mubr.f32.mxu0 0.0
    %1807 = vmatmul.mubr.f32.gmra.mxu0 %v1737
    %v1808 = vpop.f32.mrf.mxu0
    %v1809 = vadd.f32 0.0, %v1808
    %v1810 = vpop.f32.mrf.mxu0
    %1811 = vmatprep.mubr.f32.mxu0 0.0
    %1812 = vmatmul.mubr.f32.gmra.mxu0 %v1740
    %v1813 = vpop.f32.mrf.mxu0
    %v1814 = vadd.f32 0.0, %v1813
    %v1815 = vpop.f32.mrf.mxu0
    %1816 = vdwg.mxu0
    %1821 = vrot.lane.b32.xlu0 %v1374, 8
    %v1822 = vpop.permute.xlu0 %1821
    %1823 = vrot.lane.b32.xlu0 %v1379, 8
    %v1824 = vpop.permute.xlu0 %1823
    %1825 = vrot.lane.b32.xlu0 %v1461, 8
    %v1826 = vpop.permute.xlu0 %1825
    %1827 = vrot.lane.b32.xlu0 %v1466, 8
    %v1828 = vpop.permute.xlu0 %1827
    %1837 = vrot.lane.b32.xlu0 %v1548, 16
    %v1838 = vpop.permute.xlu0 %1837
    %1839 = vrot.lane.b32.xlu0 %v1553, 16
    %v1840 = vpop.permute.xlu0 %1839
    %1841 = vrot.lane.b32.xlu0 %v1635, 16
    %v1842 = vpop.permute.xlu0 %1841
    %1843 = vrot.lane.b32.xlu0 %v1640, 16
    %v1844 = vpop.permute.xlu0 %1843
    %1853 = vrot.lane.b32.xlu0 %v1722, 24
    %v1854 = vpop.permute.xlu0 %1853
    %1855 = vrot.lane.b32.xlu0 %v1727, 24
    %v1856 = vpop.permute.xlu0 %1855
    %1857 = vrot.lane.b32.xlu0 %v1809, 24
    %v1858 = vpop.permute.xlu0 %1857
    %1859 = vrot.lane.b32.xlu0 %v1814, 24
    %v1860 = vpop.permute.xlu0 %1859
    %v1865 = vsel %vm251, %v1200, %v1822
    %v1866 = vsel %vm251, %v1205, %v1824
    %v1867 = vsel %vm251, %v1287, %v1826
    %v1868 = vsel %vm251, %v1292, %v1828
    %v1869 = vsel %vm944, %v1865, %v1838
    %v1870 = vsel %vm944, %v1866, %v1840
    %v1871 = vsel %vm944, %v1867, %v1842
    %v1872 = vsel %vm944, %v1868, %v1844
    %vm1873 = vcmask 195584
    %v1874 = vsel %vm1873, %v1869, %v1854
    %v1875 = vsel %vm1873, %v1870, %v1856
    %v1876 = vsel %vm1873, %v1871, %v1858
    %v1877 = vsel %vm1873, %v1872, %v1860
    %v1878 = vld [vmem:[#allocation5] sm:$0xff]
    %v1879 = vld [vmem:[#allocation5 + $0x8] sm:$0xff]
    %v1880 = vld [vmem:[#allocation5 + $0x10] sm:$0xff]
    %v1881 = vld [vmem:[#allocation5 + $0x18] sm:$0xff]
    %v1882 = vld [vmem:[%s5] sm:$0x1]
    %v1884 = vlaneseq
    %v1885 = vshrl.u32 %v1884, 7
    %v1886 = vsub.s32 0, %v1885
    %v1887 = vrot.slane %v1882, %v1886
    %v1890 = vsel %vm110, %v1874, 0
    %v1893 = vsel %vm110, %v1875, 0
    %v1896 = vsel %vm110, %v1876, 0
    %v1899 = vsel %vm110, %v1877, 0
    %1901 = vmatprep.subr.mxu0 0.0
    %1902 = vmatpush1.msra.mxu0 0.0
    %1903 = vmatprep.subr.mxu0 0.0
    %1904 = vmatpush1.msra.mxu0 0.0
    %1905 = vmatprep.subr.mxu0 0.0
    %1906 = vmatpush1.msra.mxu0 0.0
    %1907 = vmatprep.subr.mxu0 0.0
    %1908 = vmatpush1.msra.mxu0 0.0
    %1909 = vmatprep.subr.mxu0 0.0
    %1910 = vmatpush1.msra.mxu0 0.0
    %1911 = vmatprep.subr.mxu0 0.0
    %1912 = vmatpush1.msra.mxu0 0.0
    %1913 = vmatprep.subr.mxu0 0.0
    %1914 = vmatpush1.msra.mxu0 0.0
    %1915 = vmatprep.subr.mxu0 0.0
    %1916 = vmatpush1.msra.mxu0 0.0
    %1917 = vmatprep.subr.mxu0 0.0
    %1918 = vmatpush1.msra.mxu0 0.0
    %1919 = vmatprep.subr.mxu0 0.0
    %1920 = vmatpush1.msra.mxu0 0.0
    %1921 = vmatprep.subr.mxu0 0.0
    %1922 = vmatpush1.msra.mxu0 0.0
    %1923 = vmatprep.subr.mxu0 0.0
    %1924 = vmatpush1.msra.mxu0 0.0
    %1925 = vmatprep.subr.mxu0 0.0
    %1926 = vmatpush1.msra.mxu0 %v1881
    %1927 = vmatprep.subr.mxu0 0.0
    %1928 = vmatpush1.msra.mxu0 %v1880
    %1929 = vmatprep.subr.mxu0 0.0
    %1930 = vmatpush1.msra.mxu0 %v1879
    %1931 = vmatprep.subr.mxu0 0.0
    %1932 = vmatpush1.msra.mxu0 %v1878
    %1933 = vmatprep.subr.mxu0 0.0
    %1934 = vmatpush2.msra.mxu0 0.0
    %1935 = vmatprep.subr.mxu0 0.0
    %1936 = vmatpush2.msra.mxu0 0.0
    %1937 = vmatprep.subr.mxu0 0.0
    %1938 = vmatpush2.msra.mxu0 0.0
    %1939 = vmatprep.subr.mxu0 0.0
    %1940 = vmatpush2.msra.mxu0 0.0
    %1941 = vmatprep.subr.mxu0 0.0
    %1942 = vmatpush2.msra.mxu0 0.0
    %1943 = vmatprep.subr.mxu0 0.0
    %1944 = vmatpush2.msra.mxu0 0.0
    %1945 = vmatprep.subr.mxu0 0.0
    %1946 = vmatpush2.msra.mxu0 0.0
    %1947 = vmatprep.subr.mxu0 0.0
    %1948 = vmatpush2.msra.mxu0 0.0
    %1949 = vmatprep.subr.mxu0 0.0
    %1950 = vmatpush2.msra.mxu0 0.0
    %1951 = vmatprep.subr.mxu0 0.0
    %1952 = vmatpush2.msra.mxu0 0.0
    %1953 = vmatprep.subr.mxu0 0.0
    %1954 = vmatpush2.msra.mxu0 0.0
    %1955 = vmatprep.subr.mxu0 0.0
    %1956 = vmatpush2.msra.mxu0 0.0
    %1957 = vmatprep.subr.mxu0 0.0
    %1958 = vmatpush2.msra.mxu0 0.0
    %1959 = vmatprep.subr.mxu0 0.0
    %1960 = vmatpush2.msra.mxu0 0.0
    %1961 = vmatprep.subr.mxu0 0.0
    %1962 = vmatpush2.msra.mxu0 0.0
    %1963 = vmatprep.subr.mxu0 0.0
    %1964 = vmatpush2.msra.mxu0 0.0
    %1965 = vmatprep.mubr.f32.mxu0 0.0
    %1966 = vmatmul.mubr.f32.gmra.mxu0 %v1890
    %v1967 = vpop.f32.mrf.mxu0
    %v1968 = vadd.f32 %v1887, %v1967
    %v1969 = vpop.f32.mrf.mxu0
    %1970 = vmatprep.mubr.f32.mxu0 0.0
    %1971 = vmatmul.mubr.f32.gmra.mxu0 %v1893
    %v1972 = vpop.f32.mrf.mxu0
    %v1973 = vadd.f32 %v1887, %v1972
    %v1974 = vpop.f32.mrf.mxu0
    %1975 = vmatprep.mubr.f32.mxu0 0.0
    %1976 = vmatmul.mubr.f32.gmra.mxu0 %v1896
    %v1977 = vpop.f32.mrf.mxu0
    %v1978 = vadd.f32 %v1887, %v1977
    %v1979 = vpop.f32.mrf.mxu0
    %1980 = vmatprep.mubr.f32.mxu0 0.0
    %1981 = vmatmul.mubr.f32.gmra.mxu0 %v1899
    %v1982 = vpop.f32.mrf.mxu0
    %v1983 = vadd.f32 %v1887, %v1982
    %v1984 = vpop.f32.mrf.mxu0
    %1985 = vdwg.mxu0
    %v1990 = vcombine.high %v1968, %v1968
    %v1991 = vcombine.high %v1973, %v1973
    %v1992 = vcombine.high %v1978, %v1978
    %v1993 = vcombine.high %v1983, %v1983
    %v1994 = vlaneseq
    %v1995 = vshrl.u32 %v1994, 7
    %v1996 = vsub.s32 0, %v1995
    %v1997 = vrot.slane %v1968, %v1996
    %v1998 = vlaneseq
    %v1999 = vshrl.u32 %v1998, 7
    %v2000 = vsub.s32 0, %v1999
    %v2001 = vrot.slane %v1990, %v2000
    %v2002 = vlaneseq
    %v2003 = vshrl.u32 %v2002, 7
    %v2004 = vsub.s32 0, %v2003
    %v2005 = vrot.slane %v1973, %v2004
    %v2006 = vlaneseq
    %v2007 = vshrl.u32 %v2006, 7
    %v2008 = vsub.s32 0, %v2007
    %v2009 = vrot.slane %v1991, %v2008
    %v2010 = vlaneseq
    %v2011 = vshrl.u32 %v2010, 7
    %v2012 = vsub.s32 0, %v2011
    %v2013 = vrot.slane %v1978, %v2012
    %v2014 = vlaneseq
    %v2015 = vshrl.u32 %v2014, 7
    %v2016 = vsub.s32 0, %v2015
    %v2017 = vrot.slane %v1992, %v2016
    %v2018 = vlaneseq
    %v2019 = vshrl.u32 %v2018, 7
    %v2020 = vsub.s32 0, %v2019
    %v2021 = vrot.slane %v1983, %v2020
    %v2022 = vlaneseq
    %v2023 = vshrl.u32 %v2022, 7
    %v2024 = vsub.s32 0, %v2023
    %v2025 = vrot.slane %v1993, %v2024
    %vm2026 = vcmask 1041409
    %v2027 = vsel %vm2026, %v2001, %v1997
    %vm2028 = vcmask 1042434
    %v2029 = vsel %vm2028, %v2005, %v2027
    %vm2030 = vcmask 1043459
    %v2031 = vsel %vm2030, %v2009, %v2029
    %vm2032 = vcmask 1044484
    %v2033 = vsel %vm2032, %v2013, %v2031
    %vm2034 = vcmask 1045509
    %v2035 = vsel %vm2034, %v2017, %v2033
    %vm2036 = vcmask 1046534
    %v2037 = vsel %vm2036, %v2021, %v2035
    %vm2038 = vcmask 1047559
    %v2039 = vsel %vm2038, %v2025, %v2037
    %v2041 = vlaneseq
    %v2042 = vshrl.u32 %v2041, 7
    %v2043 = vsub.s32 1, %v2042
    %v2044 = vrot.slane %v1968, %v2043
    %v2045 = vlaneseq
    %v2046 = vshrl.u32 %v2045, 7
    %v2047 = vsub.s32 1, %v2046
    %v2048 = vrot.slane %v1990, %v2047
    %v2049 = vlaneseq
    %v2050 = vshrl.u32 %v2049, 7
    %v2051 = vsub.s32 1, %v2050
    %v2052 = vrot.slane %v1973, %v2051
    %v2053 = vlaneseq
    %v2054 = vshrl.u32 %v2053, 7
    %v2055 = vsub.s32 1, %v2054
    %v2056 = vrot.slane %v1991, %v2055
    %v2057 = vlaneseq
    %v2058 = vshrl.u32 %v2057, 7
    %v2059 = vsub.s32 1, %v2058
    %v2060 = vrot.slane %v1978, %v2059
    %v2061 = vlaneseq
    %v2062 = vshrl.u32 %v2061, 7
    %v2063 = vsub.s32 1, %v2062
    %v2064 = vrot.slane %v1992, %v2063
    %v2065 = vlaneseq
    %v2066 = vshrl.u32 %v2065, 7
    %v2067 = vsub.s32 1, %v2066
    %v2068 = vrot.slane %v1983, %v2067
    %v2069 = vlaneseq
    %v2070 = vshrl.u32 %v2069, 7
    %v2071 = vsub.s32 1, %v2070
    %v2072 = vrot.slane %v1993, %v2071
    %v2073 = vsel %vm2026, %v2048, %v2044
    %v2074 = vsel %vm2028, %v2052, %v2073
    %v2075 = vsel %vm2030, %v2056, %v2074
    %v2076 = vsel %vm2032, %v2060, %v2075
    %v2077 = vsel %vm2034, %v2064, %v2076
    %v2078 = vsel %vm2036, %v2068, %v2077
    %v2079 = vsel %vm2038, %v2072, %v2078
    %2080 = vrot.lane.b32.xlu0 %v2079, 32
    %v2081 = vpop.permute.xlu0 %2080
    %v2083 = vlaneseq
    %v2084 = vshrl.u32 %v2083, 7
    %v2085 = vsub.s32 2, %v2084
    %v2086 = vrot.slane %v1968, %v2085
    %v2087 = vlaneseq
    %v2088 = vshrl.u32 %v2087, 7
    %v2089 = vsub.s32 2, %v2088
    %v2090 = vrot.slane %v1990, %v2089
    %v2091 = vlaneseq
    %v2092 = vshrl.u32 %v2091, 7
    %v2093 = vsub.s32 2, %v2092
    %v2094 = vrot.slane %v1973, %v2093
    %v2095 = vlaneseq
    %v2096 = vshrl.u32 %v2095, 7
    %v2097 = vsub.s32 2, %v2096
    %v2098 = vrot.slane %v1991, %v2097
    %v2099 = vlaneseq
    %v2100 = vshrl.u32 %v2099, 7
    %v2101 = vsub.s32 2, %v2100
    %v2102 = vrot.slane %v1978, %v2101
    %v2103 = vlaneseq
    %v2104 = vshrl.u32 %v2103, 7
    %v2105 = vsub.s32 2, %v2104
    %v2106 = vrot.slane %v1992, %v2105
    %v2107 = vlaneseq
    %v2108 = vshrl.u32 %v2107, 7
    %v2109 = vsub.s32 2, %v2108
    %v2110 = vrot.slane %v1983, %v2109
    %v2111 = vlaneseq
    %v2112 = vshrl.u32 %v2111, 7
    %v2113 = vsub.s32 2, %v2112
    %v2114 = vrot.slane %v1993, %v2113
    %v2115 = vsel %vm2026, %v2090, %v2086
    %v2116 = vsel %vm2028, %v2094, %v2115
    %v2117 = vsel %vm2030, %v2098, %v2116
    %v2118 = vsel %vm2032, %v2102, %v2117
    %v2119 = vsel %vm2034, %v2106, %v2118
    %v2120 = vsel %vm2036, %v2110, %v2119
    %v2121 = vsel %vm2038, %v2114, %v2120
    %2122 = vrot.lane.b32.xlu0 %v2121, 64
    %v2123 = vpop.permute.xlu0 %2122
    %v2125 = vlaneseq
    %v2126 = vshrl.u32 %v2125, 7
    %v2127 = vsub.s32 3, %v2126
    %v2128 = vrot.slane %v1968, %v2127
    %v2129 = vlaneseq
    %v2130 = vshrl.u32 %v2129, 7
    %v2131 = vsub.s32 3, %v2130
    %v2132 = vrot.slane %v1990, %v2131
    %v2133 = vlaneseq
    %v2134 = vshrl.u32 %v2133, 7
    %v2135 = vsub.s32 3, %v2134
    %v2136 = vrot.slane %v1973, %v2135
    %v2137 = vlaneseq
    %v2138 = vshrl.u32 %v2137, 7
    %v2139 = vsub.s32 3, %v2138
    %v2140 = vrot.slane %v1991, %v2139
    %v2141 = vlaneseq
    %v2142 = vshrl.u32 %v2141, 7
    %v2143 = vsub.s32 3, %v2142
    %v2144 = vrot.slane %v1978, %v2143
    %v2145 = vlaneseq
    %v2146 = vshrl.u32 %v2145, 7
    %v2147 = vsub.s32 3, %v2146
    %v2148 = vrot.slane %v1992, %v2147
    %v2149 = vlaneseq
    %v2150 = vshrl.u32 %v2149, 7
    %v2151 = vsub.s32 3, %v2150
    %v2152 = vrot.slane %v1983, %v2151
    %v2153 = vlaneseq
    %v2154 = vshrl.u32 %v2153, 7
    %v2155 = vsub.s32 3, %v2154
    %v2156 = vrot.slane %v1993, %v2155
    %v2157 = vsel %vm2026, %v2132, %v2128
    %v2158 = vsel %vm2028, %v2136, %v2157
    %v2159 = vsel %vm2030, %v2140, %v2158
    %v2160 = vsel %vm2032, %v2144, %v2159
    %v2161 = vsel %vm2034, %v2148, %v2160
    %v2162 = vsel %vm2036, %v2152, %v2161
    %v2163 = vsel %vm2038, %v2156, %v2162
    %2164 = vrot.lane.b32.xlu0 %v2163, 96
    %v2165 = vpop.permute.xlu0 %2164
    %v2167 = vsel %vm110, %v2039, %v2081
    %vm2168 = vcmask 523264
    %v2169 = vsel %vm2168, %v2167, %v2123
    %vm2170 = vcmask 785408
    %v2171 = vsel %vm2170, %v2169, %v2165
    %2172 = vst [vmem:[%s7] sm:$0xff] %v2171
    // Predicated region
    $region42: #{attention_forward.1} parent=1 // pred_check
      _
    $region43: #{attention_forward.1} parent=1 // pred_check_branch
      %2174 = sbr.rel (0) target = $region45
    $region44: #{attention_forward.1} parent=1 // pred_region
      _
    $region45: #{attention_forward.1} parent=1 // pred_fallthru
      _
    // Predicated region
    $region46: #{attention_forward.1} parent=1 // pred_check
      _
    $region47: #{attention_forward.1} parent=1 // pred_check_branch
      %2176 = sbr.rel (0) target = $region49
    $region48: #{attention_forward.1} parent=1 // pred_region
      _
    $region49: #{attention_forward.1} parent=1 // pred_fallthru
      _
    %2177 = vsyncpa [#allocation4], 1
    %2178 = vsyncpa [#allocation6], 1

</llo_original>
